<compile_context>
chip_gen: v6e
topology: v6e:2x2x1
jax: 0.10.0
libtpu: 0.0.40
codegen_flags: <defaults>
</compile_context>

<pallas_src>
import math

import jax
import jax.numpy as jnp
from jax.experimental import pallas as pl
from jax.experimental.pallas import tpu as pltpu

BN_EPS = 1e-5
_LANE = 128


def _round_up_lane(n):
    return ((n + _LANE - 1) // _LANE) * _LANE


# ------------------------------ fused kernel --------------------------------


def _siamese_arm_kernel(patch_ref, wconv_ref,
                        pw1_ref, pgamma_ref, pbeta_ref, pw2_ref, pb2_ref,
                        qw1_ref, qgamma_ref, qbeta_ref, qw2_ref, qb2_ref,
                        y_ref, z_ref, h_ref):
    """Single grid step over the whole batch.

    Encoder: one im2col matmul (B*HW, 128)x(128, CFEAT_P) on the MXU
    (bf16 operands, f32 accumulation), ReLU, per-image global mean pool.
    Projector / predictor: Linear(no bias) -> BatchNorm1d (training batch
    stats) -> ReLU -> Linear(bias) on the VMEM-resident pooled features.
    All widths are 128-padded -> lane-dense matmuls and stores.
    """
    B, cfeat_p = y_ref.shape
    bhw = patch_ref.shape[0]
    hw = bhw // B

    # ---- encoder: single K=128 MXU matmul, no VMEM accumulator ----
    conv = jnp.dot(patch_ref[...], wconv_ref[...],
                   preferred_element_type=jnp.float32)          # (B*HW, CFEAT_P) f32
    act = jnp.maximum(conv, 0.0)                                # ReLU (f32)
    pooled = jnp.mean(act.reshape(B, hw, cfeat_p), axis=1)      # (B, CFEAT_P) f32

    # ---- MLPs on the VMEM-resident batch features ----
    def mlp(x, w1_ref, gamma_ref, beta_ref, w2_ref, bias_ref):
        # Linear(no bias) -> BatchNorm1d (training batch stats, biased
        # variance) -> ReLU -> Linear(bias). bf16 MXU operands, f32 math.
        pre = jnp.dot(x.astype(jnp.bfloat16), w1_ref[...],
                      preferred_element_type=jnp.float32)
        mean = jnp.mean(pre, axis=0, keepdims=True)
        var = jnp.mean((pre - mean) ** 2, axis=0, keepdims=True)
        normed = ((pre - mean) * jax.lax.rsqrt(var + BN_EPS)
                  * gamma_ref[...] + beta_ref[...])
        r = jnp.maximum(normed, 0.0)
        return (jnp.dot(r.astype(jnp.bfloat16), w2_ref[...],
                        preferred_element_type=jnp.float32)
                + bias_ref[...])

    y_ref[...] = pooled
    z = mlp(pooled, pw1_ref, pgamma_ref, pbeta_ref, pw2_ref, pb2_ref)
    z_ref[...] = z
    h = mlp(z, qw1_ref, qgamma_ref, qbeta_ref, qw2_ref, qb2_ref)
    h_ref[...] = h


# --------------------------------- wrapper ----------------------------------


def siamese_arm_forward(x_nchw, params, *, cfeat, out_dim):
    """Mirrors SiameseArm.forward: returns (y, z, h) at their real widths."""
    B, cin, H, W = x_nchw.shape
    hw = H * W
    K = 9 * cin

    wconv = params["conv_w"]                       # (K_PAD, CFEAT_P) bf16
    k_pad, cfeat_p = wconv.shape
    proj, pred = params["projector"], params["predictor"]
    hid_p = proj["w1"].shape[-1]
    out_p = proj["w2"].shape[-1]

    # ---- wrapper-side im2col: (B*H*W, 9*Cin) patch slab, 128-padded, bf16 ----
    x = jnp.transpose(x_nchw, (0, 2, 3, 1)).astype(jnp.float32)   # NCHW -> NHWC
    xpad = jnp.pad(x, ((0, 0), (1, 1), (1, 1), (0, 0)))           # 3x3 zero pad
    taps = [xpad[:, kh:kh + H, kw:kw + W, :]
            for kh in range(3) for kw in range(3)]                # 9 x (B,H,W,Cin)
    patches = jnp.concatenate(taps, axis=-1).reshape(B * hw, K)   # (BHW, 9*Cin)
    patches = jnp.pad(patches, ((0, 0), (0, k_pad - K))).astype(jnp.bfloat16)

    def mlp_args(p):
        return (p["w1"], p["gamma"], p["beta"], p["w2"], p["b2"])

    operands = (patches, wconv) + mlp_args(proj) + mlp_args(pred)

    flops = int(2 * B * hw * k_pad * cfeat_p                 # encoder matmul
                + 2 * B * (cfeat_p + out_p) * hid_p          # first Linear of each MLP
                + 2 * B * 2 * hid_p * out_p)                 # second Linear of each MLP
    bytes_accessed = int(sum(int(a.size) * a.dtype.itemsize for a in operands)
                         + B * (cfeat_p + 2 * out_p) * 4)

    def _whole(a):
        nd = a.ndim
        return pl.BlockSpec(a.shape, lambda i, _nd=nd: (0,) * _nd)

    y_p, z_p, h_p = pl.pallas_call(
        _siamese_arm_kernel,
        out_shape=(jax.ShapeDtypeStruct((B, cfeat_p), jnp.float32),
                   jax.ShapeDtypeStruct((B, out_p), jnp.float32),
                   jax.ShapeDtypeStruct((B, out_p), jnp.float32)),
        grid=(1,),                                  # whole batch in one step
        in_specs=[_whole(a) for a in operands],
        out_specs=(pl.BlockSpec((B, cfeat_p), lambda i: (0, 0)),
                   pl.BlockSpec((B, out_p), lambda i: (0, 0)),
                   pl.BlockSpec((B, out_p), lambda i: (0, 0))),
        compiler_params=pltpu.CompilerParams(
            dimension_semantics=("arbitrary",),
            vmem_limit_bytes=32 * 1024 * 1024),
        cost_estimate=pl.CostEstimate(flops=flops, transcendentals=2 * hid_p,
                                      bytes_accessed=bytes_accessed),
    )(*operands)

    # slice the real feature widths back out (kernel outputs are 128-padded)
    return y_p[:, :cfeat], z_p[:, :out_dim], h_p[:, :out_dim]


# --------------------------- deterministic init ------------------------------


def _uniform(key, shape, bound):
    return jax.random.uniform(key, shape, jnp.float32, minval=-bound, maxval=bound)


def init_mlp_params(key, din, hidden, dout, din_p, hid_p, out_p):
    """PyTorch-default-init MLP params, zero-padded to lane-dense (128) widths."""
    k1, k2, k3 = jax.random.split(key, 3)
    w1 = _uniform(k1, (din, hidden), 1.0 / math.sqrt(din))       # Linear, bias=False
    w2 = _uniform(k2, (hidden, dout), 1.0 / math.sqrt(hidden))   # Linear, bias=True
    b2 = _uniform(k3, (dout,), 1.0 / math.sqrt(hidden))
    w1p = jnp.zeros((din_p, hid_p), jnp.float32).at[:din, :hidden].set(w1)
    w2p = jnp.zeros((hid_p, out_p), jnp.float32).at[:hidden, :dout].set(w2)
    return {
        "w1": w1p.astype(jnp.bfloat16),                          # MXU operand
        "gamma": jnp.zeros((1, hid_p), jnp.float32).at[0, :hidden].set(1.0),
        "beta": jnp.zeros((1, hid_p), jnp.float32),
        "w2": w2p.astype(jnp.bfloat16),                          # MXU operand
        "b2": jnp.zeros((1, out_p), jnp.float32).at[0, :dout].set(b2),
    }


def init_siamese_arm_params(key, cin=4, cfeat=64, hidden_size=32, out_dim=16):
    kc, kproj, kpred = jax.random.split(key, 3)
    cfeat_p = _round_up_lane(cfeat)
    hid_p = _round_up_lane(hidden_size)
    out_p = _round_up_lane(out_dim)
    K = 9 * cin
    k_pad = _round_up_lane(K)
    wc = _uniform(kc, (3, 3, cin, cfeat), 1.0 / math.sqrt(K))    # conv2d default init
    # rows ordered (kh, kw, cin) -> matches the wrapper's im2col tap order
    wc_p = (jnp.zeros((k_pad, cfeat_p), jnp.float32)
            .at[:K, :cfeat].set(wc.reshape(K, cfeat)))
    return {
        "conv_w": wc_p.astype(jnp.bfloat16),
        # projector_dim = encoder feature width (== encoder.l1.in_features)
        "projector": init_mlp_params(kproj, cfeat, hidden_size, out_dim,
                                     cfeat_p, hid_p, out_p),
        "predictor": init_mlp_params(kpred, out_dim, hidden_size, out_dim,
                                     out_p, hid_p, out_p),
    }


# ----------------------------------- main ------------------------------------

if __name__ == "__main__":
    B, Cin, H, W = 2, 4, 16, 16
    CFEAT, HIDDEN, OUT = 64, 32, 16

    kp, kx = jax.random.split(jax.random.PRNGKey(0), 2)
    params = init_siamese_arm_params(kp, cin=Cin, cfeat=CFEAT,
                                     hidden_size=HIDDEN, out_dim=OUT)
    x = jax.random.normal(kx, (B, Cin, H, W), jnp.float32)

    fwd = jax.jit(lambda xx, pp: siamese_arm_forward(xx, pp,
                                                     cfeat=CFEAT, out_dim=OUT))
    y, z, h = fwd(x, params)
    jax.block_until_ready((y, z, h))

    assert y.shape == (B, CFEAT) and z.shape == (B, OUT) and h.shape == (B, OUT)
    assert jnp.all(jnp.isfinite(y)) and jnp.all(jnp.isfinite(z)) and jnp.all(jnp.isfinite(h))
    print("KERNEL_OK")
</pallas_src>

<mosaic_0001>
module attributes {stable_mosaic.version = 11 : i64} {
  func.func @_siamese_arm_kernel(%arg0: i32, %arg1: memref<512x128xbf16, #tpu.memory_space<vmem>>, %arg2: memref<128x128xbf16, #tpu.memory_space<vmem>>, %arg3: memref<128x128xbf16, #tpu.memory_space<vmem>>, %arg4: memref<1x128xf32, #tpu.memory_space<vmem>>, %arg5: memref<1x128xf32, #tpu.memory_space<vmem>>, %arg6: memref<128x128xbf16, #tpu.memory_space<vmem>>, %arg7: memref<1x128xf32, #tpu.memory_space<vmem>>, %arg8: memref<128x128xbf16, #tpu.memory_space<vmem>>, %arg9: memref<1x128xf32, #tpu.memory_space<vmem>>, %arg10: memref<1x128xf32, #tpu.memory_space<vmem>>, %arg11: memref<128x128xbf16, #tpu.memory_space<vmem>>, %arg12: memref<1x128xf32, #tpu.memory_space<vmem>>, %arg13: memref<2x128xf32, #tpu.memory_space<vmem>>, %arg14: memref<2x128xf32, #tpu.memory_space<vmem>>, %arg15: memref<2x128xf32, #tpu.memory_space<vmem>>) attributes {dimension_semantics = [#tpu.dimension_semantics<arbitrary>], iteration_bounds = array<i64: 1>, scalar_prefetch = 0 : i64, scratch_operands = 0 : i64, tpu.core_type = #tpu.core_type<tc>, window_params = [{pipeline_mode = #tpu.pipeline_mode<synchronous>, transform_indices = @transform_0, window_bounds = array<i64: 512, 128>}, {pipeline_mode = #tpu.pipeline_mode<synchronous>, transform_indices = @transform_1, window_bounds = array<i64: 128, 128>}, {pipeline_mode = #tpu.pipeline_mode<synchronous>, transform_indices = @transform_2, window_bounds = array<i64: 128, 128>}, {pipeline_mode = #tpu.pipeline_mode<synchronous>, transform_indices = @transform_3, window_bounds = array<i64: 1, 128>}, {pipeline_mode = #tpu.pipeline_mode<synchronous>, transform_indices = @transform_4, window_bounds = array<i64: 1, 128>}, {pipeline_mode = #tpu.pipeline_mode<synchronous>, transform_indices = @transform_5, window_bounds = array<i64: 128, 128>}, {pipeline_mode = #tpu.pipeline_mode<synchronous>, transform_indices = @transform_6, window_bounds = array<i64: 1, 128>}, {pipeline_mode = #tpu.pipeline_mode<synchronous>, transform_indices = @transform_7, window_bounds = array<i64: 128, 128>}, {pipeline_mode = #tpu.pipeline_mode<synchronous>, transform_indices = @transform_8, window_bounds = array<i64: 1, 128>}, {pipeline_mode = #tpu.pipeline_mode<synchronous>, transform_indices = @transform_9, window_bounds = array<i64: 1, 128>}, {pipeline_mode = #tpu.pipeline_mode<synchronous>, transform_indices = @transform_10, window_bounds = array<i64: 128, 128>}, {pipeline_mode = #tpu.pipeline_mode<synchronous>, transform_indices = @transform_11, window_bounds = array<i64: 1, 128>}, {pipeline_mode = #tpu.pipeline_mode<synchronous>, transform_indices = @transform_12, window_bounds = array<i64: 2, 128>}, {pipeline_mode = #tpu.pipeline_mode<synchronous>, transform_indices = @transform_13, window_bounds = array<i64: 2, 128>}, {pipeline_mode = #tpu.pipeline_mode<synchronous>, transform_indices = @transform_14, window_bounds = array<i64: 2, 128>}]} {
    %c0 = arith.constant 0 : index
    %c0_0 = arith.constant 0 : index
    %0 = vector.load %arg1[%c0, %c0_0] : memref<512x128xbf16, #tpu.memory_space<vmem>>, vector<512x128xbf16>
    %c0_1 = arith.constant 0 : index
    %c0_2 = arith.constant 0 : index
    %1 = vector.load %arg2[%c0_1, %c0_2] : memref<128x128xbf16, #tpu.memory_space<vmem>>, vector<128x128xbf16>
    %cst = arith.constant dense<0.000000e+00> : vector<512x128xf32>
    %2 = tpu.matmul %0, %1, %cst {dimension_numbers = #tpu.dot_dimension_numbers<[1], [0], [0], [1], [0, 0, 1, 1], [], []>} : vector<512x128xbf16>, vector<128x128xbf16>, vector<512x128xf32> -> vector<512x128xf32>
    %cst_3 = arith.constant 0.000000e+00 : f32
    %3 = vector.broadcast %cst_3 : f32 to vector<512x128xf32>
    %4 = arith.maximumf %2, %3 : vector<512x128xf32>
    %5 = vector.shape_cast %4 : vector<512x128xf32> to vector<2x256x128xf32>
    %cst_4 = arith.constant dense<0.000000e+00> : vector<2x128xf32>
    %6 = vector.multi_reduction <add>, %5, %cst_4 [1] : vector<2x256x128xf32> to vector<2x128xf32>
    %cst_5 = arith.constant 2.560000e+02 : f32
    %7 = vector.broadcast %cst_5 : f32 to vector<2x128xf32>
    %8 = arith.divf %6, %7 : vector<2x128xf32>
    %c0_6 = arith.constant 0 : index
    %c0_7 = arith.constant 0 : index
    %9 = vector.load %arg13[%c0_6, %c0_7] : memref<2x128xf32, #tpu.memory_space<vmem>>, vector<2x128xf32>
    tpu.vector_store %arg13[%c0_6, %c0_7], %8 {strides = array<i32>} : memref<2x128xf32, #tpu.memory_space<vmem>>, vector<2x128xf32>,
    %10 = arith.truncf %8 : vector<2x128xf32> to vector<2x128xbf16>
    %c0_8 = arith.constant 0 : index
    %c0_9 = arith.constant 0 : index
    %11 = vector.load %arg3[%c0_8, %c0_9] : memref<128x128xbf16, #tpu.memory_space<vmem>>, vector<128x128xbf16>
    %cst_10 = arith.constant dense<0.000000e+00> : vector<2x128xf32>
    %12 = tpu.matmul %10, %11, %cst_10 {dimension_numbers = #tpu.dot_dimension_numbers<[1], [0], [0], [1], [0, 0, 1, 1], [], []>} : vector<2x128xbf16>, vector<128x128xbf16>, vector<2x128xf32> -> vector<2x128xf32>
    %cst_11 = arith.constant dense<0.000000e+00> : vector<128xf32>
    %13 = vector.multi_reduction <add>, %12, %cst_11 [0] : vector<2x128xf32> to vector<128xf32>
    %14 = vector.shape_cast %13 : vector<128xf32> to vector<1x128xf32>
    %cst_12 = arith.constant 2.000000e+00 : f32
    %15 = vector.broadcast %cst_12 : f32 to vector<1x128xf32>
    %16 = arith.divf %14, %15 : vector<1x128xf32>
    %17 = vector.broadcast %16 : vector<1x128xf32> to vector<2x128xf32>
    %18 = arith.subf %12, %17 : vector<2x128xf32>
    %19 = arith.mulf %18, %18 : vector<2x128xf32>
    %cst_13 = arith.constant dense<0.000000e+00> : vector<128xf32>
    %20 = vector.multi_reduction <add>, %19, %cst_13 [0] : vector<2x128xf32> to vector<128xf32>
    %21 = vector.shape_cast %20 : vector<128xf32> to vector<1x128xf32>
    %cst_14 = arith.constant 2.000000e+00 : f32
    %22 = vector.broadcast %cst_14 : f32 to vector<1x128xf32>
    %23 = arith.divf %21, %22 : vector<1x128xf32>
    %24 = vector.broadcast %16 : vector<1x128xf32> to vector<2x128xf32>
    %25 = arith.subf %12, %24 : vector<2x128xf32>
    %cst_15 = arith.constant 9.99999974E-6 : f32
    %26 = vector.broadcast %cst_15 : f32 to vector<1x128xf32>
    %27 = arith.addf %23, %26 : vector<1x128xf32>
    %28 = math.rsqrt %27 : vector<1x128xf32>
    %29 = vector.broadcast %28 : vector<1x128xf32> to vector<2x128xf32>
    %30 = arith.mulf %25, %29 : vector<2x128xf32>
    %c0_16 = arith.constant 0 : index
    %c0_17 = arith.constant 0 : index
    %31 = vector.load %arg4[%c0_16, %c0_17] : memref<1x128xf32, #tpu.memory_space<vmem>>, vector<1x128xf32>
    %32 = vector.broadcast %31 : vector<1x128xf32> to vector<2x128xf32>
    %33 = arith.mulf %30, %32 : vector<2x128xf32>
    %c0_18 = arith.constant 0 : index
    %c0_19 = arith.constant 0 : index
    %34 = vector.load %arg5[%c0_18, %c0_19] : memref<1x128xf32, #tpu.memory_space<vmem>>, vector<1x128xf32>
    %35 = vector.broadcast %34 : vector<1x128xf32> to vector<2x128xf32>
    %36 = arith.addf %33, %35 : vector<2x128xf32>
    %cst_20 = arith.constant 0.000000e+00 : f32
    %37 = vector.broadcast %cst_20 : f32 to vector<2x128xf32>
    %38 = arith.maximumf %36, %37 : vector<2x128xf32>
    %39 = arith.truncf %38 : vector<2x128xf32> to vector<2x128xbf16>
    %c0_21 = arith.constant 0 : index
    %c0_22 = arith.constant 0 : index
    %40 = vector.load %arg6[%c0_21, %c0_22] : memref<128x128xbf16, #tpu.memory_space<vmem>>, vector<128x128xbf16>
    %cst_23 = arith.constant dense<0.000000e+00> : vector<2x128xf32>
    %41 = tpu.matmul %39, %40, %cst_23 {dimension_numbers = #tpu.dot_dimension_numbers<[1], [0], [0], [1], [0, 0, 1, 1], [], []>} : vector<2x128xbf16>, vector<128x128xbf16>, vector<2x128xf32> -> vector<2x128xf32>
    %c0_24 = arith.constant 0 : index
    %c0_25 = arith.constant 0 : index
    %42 = vector.load %arg7[%c0_24, %c0_25] : memref<1x128xf32, #tpu.memory_space<vmem>>, vector<1x128xf32>
    %43 = vector.broadcast %42 : vector<1x128xf32> to vector<2x128xf32>
    %44 = arith.addf %41, %43 : vector<2x128xf32>
    %c0_26 = arith.constant 0 : index
    %c0_27 = arith.constant 0 : index
    %45 = vector.load %arg14[%c0_26, %c0_27] : memref<2x128xf32, #tpu.memory_space<vmem>>, vector<2x128xf32>
    tpu.vector_store %arg14[%c0_26, %c0_27], %44 {strides = array<i32>} : memref<2x128xf32, #tpu.memory_space<vmem>>, vector<2x128xf32>,
    %46 = arith.truncf %44 : vector<2x128xf32> to vector<2x128xbf16>
    %c0_28 = arith.constant 0 : index
    %c0_29 = arith.constant 0 : index
    %47 = vector.load %arg8[%c0_28, %c0_29] : memref<128x128xbf16, #tpu.memory_space<vmem>>, vector<128x128xbf16>
    %cst_30 = arith.constant dense<0.000000e+00> : vector<2x128xf32>
    %48 = tpu.matmul %46, %47, %cst_30 {dimension_numbers = #tpu.dot_dimension_numbers<[1], [0], [0], [1], [0, 0, 1, 1], [], []>} : vector<2x128xbf16>, vector<128x128xbf16>, vector<2x128xf32> -> vector<2x128xf32>
    %cst_31 = arith.constant dense<0.000000e+00> : vector<128xf32>
    %49 = vector.multi_reduction <add>, %48, %cst_31 [0] : vector<2x128xf32> to vector<128xf32>
    %50 = vector.shape_cast %49 : vector<128xf32> to vector<1x128xf32>
    %cst_32 = arith.constant 2.000000e+00 : f32
    %51 = vector.broadcast %cst_32 : f32 to vector<1x128xf32>
    %52 = arith.divf %50, %51 : vector<1x128xf32>
    %53 = vector.broadcast %52 : vector<1x128xf32> to vector<2x128xf32>
    %54 = arith.subf %48, %53 : vector<2x128xf32>
    %55 = arith.mulf %54, %54 : vector<2x128xf32>
    %cst_33 = arith.constant dense<0.000000e+00> : vector<128xf32>
    %56 = vector.multi_reduction <add>, %55, %cst_33 [0] : vector<2x128xf32> to vector<128xf32>
    %57 = vector.shape_cast %56 : vector<128xf32> to vector<1x128xf32>
    %cst_34 = arith.constant 2.000000e+00 : f32
    %58 = vector.broadcast %cst_34 : f32 to vector<1x128xf32>
    %59 = arith.divf %57, %58 : vector<1x128xf32>
    %60 = vector.broadcast %52 : vector<1x128xf32> to vector<2x128xf32>
    %61 = arith.subf %48, %60 : vector<2x128xf32>
    %cst_35 = arith.constant 9.99999974E-6 : f32
    %62 = vector.broadcast %cst_35 : f32 to vector<1x128xf32>
    %63 = arith.addf %59, %62 : vector<1x128xf32>
    %64 = math.rsqrt %63 : vector<1x128xf32>
    %65 = vector.broadcast %64 : vector<1x128xf32> to vector<2x128xf32>
    %66 = arith.mulf %61, %65 : vector<2x128xf32>
    %c0_36 = arith.constant 0 : index
    %c0_37 = arith.constant 0 : index
    %67 = vector.load %arg9[%c0_36, %c0_37] : memref<1x128xf32, #tpu.memory_space<vmem>>, vector<1x128xf32>
    %68 = vector.broadcast %67 : vector<1x128xf32> to vector<2x128xf32>
    %69 = arith.mulf %66, %68 : vector<2x128xf32>
    %c0_38 = arith.constant 0 : index
    %c0_39 = arith.constant 0 : index
    %70 = vector.load %arg10[%c0_38, %c0_39] : memref<1x128xf32, #tpu.memory_space<vmem>>, vector<1x128xf32>
    %71 = vector.broadcast %70 : vector<1x128xf32> to vector<2x128xf32>
    %72 = arith.addf %69, %71 : vector<2x128xf32>
    %cst_40 = arith.constant 0.000000e+00 : f32
    %73 = vector.broadcast %cst_40 : f32 to vector<2x128xf32>
    %74 = arith.maximumf %72, %73 : vector<2x128xf32>
    %75 = arith.truncf %74 : vector<2x128xf32> to vector<2x128xbf16>
    %c0_41 = arith.constant 0 : index
    %c0_42 = arith.constant 0 : index
    %76 = vector.load %arg11[%c0_41, %c0_42] : memref<128x128xbf16, #tpu.memory_space<vmem>>, vector<128x128xbf16>
    %cst_43 = arith.constant dense<0.000000e+00> : vector<2x128xf32>
    %77 = tpu.matmul %75, %76, %cst_43 {dimension_numbers = #tpu.dot_dimension_numbers<[1], [0], [0], [1], [0, 0, 1, 1], [], []>} : vector<2x128xbf16>, vector<128x128xbf16>, vector<2x128xf32> -> vector<2x128xf32>
    %c0_44 = arith.constant 0 : index
    %c0_45 = arith.constant 0 : index
    %78 = vector.load %arg12[%c0_44, %c0_45] : memref<1x128xf32, #tpu.memory_space<vmem>>, vector<1x128xf32>
    %79 = vector.broadcast %78 : vector<1x128xf32> to vector<2x128xf32>
    %80 = arith.addf %77, %79 : vector<2x128xf32>
    %c0_46 = arith.constant 0 : index
    %c0_47 = arith.constant 0 : index
    %81 = vector.load %arg15[%c0_46, %c0_47] : memref<2x128xf32, #tpu.memory_space<vmem>>, vector<2x128xf32>
    tpu.vector_store %arg15[%c0_46, %c0_47], %80 {strides = array<i32>} : memref<2x128xf32, #tpu.memory_space<vmem>>, vector<2x128xf32>,
    return
  }
  func.func @transform_0(%arg0: i32) -> (i32, i32) {
    %c0_i32 = arith.constant 0 : i32
    %c0_i32_0 = arith.constant 0 : i32
    %c0_i32_1 = arith.constant 0 : i32
    return %c0_i32, %c0_i32_0 : i32, i32
  }
  func.func @transform_1(%arg0: i32) -> (i32, i32) {
    %c0_i32 = arith.constant 0 : i32
    %c0_i32_0 = arith.constant 0 : i32
    %c0_i32_1 = arith.constant 0 : i32
    return %c0_i32, %c0_i32_0 : i32, i32
  }
  func.func @transform_2(%arg0: i32) -> (i32, i32) {
    %c0_i32 = arith.constant 0 : i32
    %c0_i32_0 = arith.constant 0 : i32
    %c0_i32_1 = arith.constant 0 : i32
    return %c0_i32, %c0_i32_0 : i32, i32
  }
  func.func @transform_3(%arg0: i32) -> (i32, i32) {
    %c0_i32 = arith.constant 0 : i32
    %c0_i32_0 = arith.constant 0 : i32
    %c0_i32_1 = arith.constant 0 : i32
    return %c0_i32, %c0_i32_0 : i32, i32
  }
  func.func @transform_4(%arg0: i32) -> (i32, i32) {
    %c0_i32 = arith.constant 0 : i32
    %c0_i32_0 = arith.constant 0 : i32
    %c0_i32_1 = arith.constant 0 : i32
    return %c0_i32, %c0_i32_0 : i32, i32
  }
  func.func @transform_5(%arg0: i32) -> (i32, i32) {
    %c0_i32 = arith.constant 0 : i32
    %c0_i32_0 = arith.constant 0 : i32
    %c0_i32_1 = arith.constant 0 : i32
    return %c0_i32, %c0_i32_0 : i32, i32
  }
  func.func @transform_6(%arg0: i32) -> (i32, i32) {
    %c0_i32 = arith.constant 0 : i32
    %c0_i32_0 = arith.constant 0 : i32
    %c0_i32_1 = arith.constant 0 : i32
    return %c0_i32, %c0_i32_0 : i32, i32
  }
  func.func @transform_7(%arg0: i32) -> (i32, i32) {
    %c0_i32 = arith.constant 0 : i32
    %c0_i32_0 = arith.constant 0 : i32
    %c0_i32_1 = arith.constant 0 : i32
    return %c0_i32, %c0_i32_0 : i32, i32
  }
  func.func @transform_8(%arg0: i32) -> (i32, i32) {
    %c0_i32 = arith.constant 0 : i32
    %c0_i32_0 = arith.constant 0 : i32
    %c0_i32_1 = arith.constant 0 : i32
    return %c0_i32, %c0_i32_0 : i32, i32
  }
  func.func @transform_9(%arg0: i32) -> (i32, i32) {
    %c0_i32 = arith.constant 0 : i32
    %c0_i32_0 = arith.constant 0 : i32
    %c0_i32_1 = arith.constant 0 : i32
    return %c0_i32, %c0_i32_0 : i32, i32
  }
  func.func @transform_10(%arg0: i32) -> (i32, i32) {
    %c0_i32 = arith.constant 0 : i32
    %c0_i32_0 = arith.constant 0 : i32
    %c0_i32_1 = arith.constant 0 : i32
    return %c0_i32, %c0_i32_0 : i32, i32
  }
  func.func @transform_11(%arg0: i32) -> (i32, i32) {
    %c0_i32 = arith.constant 0 : i32
    %c0_i32_0 = arith.constant 0 : i32
    %c0_i32_1 = arith.constant 0 : i32
    return %c0_i32, %c0_i32_0 : i32, i32
  }
  func.func @transform_12(%arg0: i32) -> (i32, i32) {
    %c0_i32 = arith.constant 0 : i32
    %c0_i32_0 = arith.constant 0 : i32
    %c0_i32_1 = arith.constant 0 : i32
    return %c0_i32, %c0_i32_0 : i32, i32
  }
  func.func @transform_13(%arg0: i32) -> (i32, i32) {
    %c0_i32 = arith.constant 0 : i32
    %c0_i32_0 = arith.constant 0 : i32
    %c0_i32_1 = arith.constant 0 : i32
    return %c0_i32, %c0_i32_0 : i32, i32
  }
  func.func @transform_14(%arg0: i32) -> (i32, i32) {
    %c0_i32 = arith.constant 0 : i32
    %c0_i32_0 = arith.constant 0 : i32
    %c0_i32_1 = arith.constant 0 : i32
    return %c0_i32, %c0_i32_0 : i32, i32
  }
}

</mosaic_0001>

<llo_original>
// kernel: _lambda_.1
$region0: #{_lambda_.1}
  #allocation0 [shape = 'u32[]', space=smem, size = 0x4, offset = 0x4, fixed_abs, tag = 'smem constant byte address 0x4 - core index']
  #allocation1 [shape = 'u32[144,128]{1,0:T(1,128)}', space=vmem, size = 0x12000, scoped, tag = 'internal scratch']
  %s0 = inlined_call_operand.vmem [shape: bf16[512,128], index: 0, kind: input, shape index: {}]
  %s1 = inlined_call_operand.vmem [shape: bf16[128,128], index: 1, kind: input, shape index: {}]
  %s2 = inlined_call_operand.vmem [shape: bf16[128,128], index: 2, kind: input, shape index: {}]
  %s3 = inlined_call_operand.vmem [shape: f32[1,128], index: 3, kind: input, shape index: {}]
  %s4 = inlined_call_operand.vmem [shape: f32[1,128], index: 4, kind: input, shape index: {}]
  %s5 = inlined_call_operand.vmem [shape: bf16[128,128], index: 5, kind: input, shape index: {}]
  %s6 = inlined_call_operand.vmem [shape: f32[1,128], index: 6, kind: input, shape index: {}]
  %s7 = inlined_call_operand.vmem [shape: bf16[128,128], index: 7, kind: input, shape index: {}]
  %s8 = inlined_call_operand.vmem [shape: f32[1,128], index: 8, kind: input, shape index: {}]
  %s9 = inlined_call_operand.vmem [shape: f32[1,128], index: 9, kind: input, shape index: {}]
  %s10 = inlined_call_operand.vmem [shape: bf16[128,128], index: 10, kind: input, shape index: {}]
  %s11 = inlined_call_operand.vmem [shape: f32[1,128], index: 11, kind: input, shape index: {}]
  %s12 = inlined_call_operand.hbm [shape: f32[2,128], index: 12, kind: output, shape index: {0}]
  %s13 = inlined_call_operand.hbm [shape: f32[2,128], index: 13, kind: output, shape index: {1}]
  %s14 = inlined_call_operand.hbm [shape: f32[2,128], index: 14, kind: output, shape index: {2}]
  %15 = xla_tuple %s12, %s13, %s14
  %s16 = sld [smem:[#allocation0]]
  $region74: #{_lambda_.1} parent=0
    _
  %s18 = ssub.s32 1, %s16
  %s19 = scalar_select 0, %s18, %s16
  $region1: #{_lambda_.1} parent=0
    #allocation2 [shape = 'u8[1024]{0}', space=vmem, size = 0x400, scoped, tag = 'output window, operand 0, single buffered']
    #allocation3 [shape = 's32[1]{0}', space=sflag, size = 0x4, scoped, tag = 'scoped memory for _lambda_.1']
    #allocation4 [shape = 'u8[1024]{0}', space=vmem, size = 0x400, scoped, tag = 'output window, operand 1, single buffered']
    #allocation5 [shape = 's32[1]{0}', space=sflag, size = 0x4, scoped, tag = 'scoped memory for _lambda_.1']
    #allocation6 [shape = 'u8[1024]{0}', space=vmem, size = 0x400, scoped, tag = 'output window, operand 2, single buffered']
    %20 = vsyncpa [#allocation3], 0
    %21 = vsyncpa [#allocation5], 0
    // Predicated region
    $region2: #{_lambda_.1} parent=1 // pred_check
      _
    $region3: #{_lambda_.1} parent=1 // pred_check_branch
      %23 = sbr.rel (0) target = $region5
    $region4: #{_lambda_.1} parent=1 // pred_region
      _
    $region5: #{_lambda_.1} parent=1 // pred_fallthru
      _
    // Predicated region
    $region6: #{_lambda_.1} parent=1 // pred_check
      _
    $region7: #{_lambda_.1} parent=1 // pred_check_branch
      %25 = sbr.rel (0) target = $region9
    $region8: #{_lambda_.1} parent=1 // pred_region
      _
    $region9: #{_lambda_.1} parent=1 // pred_fallthru
      _
    // Predicated region
    $region10: #{_lambda_.1} parent=1 // pred_check
      _
    $region11: #{_lambda_.1} parent=1 // pred_check_branch
      %27 = sbr.rel (0) target = $region13
    $region12: #{_lambda_.1} parent=1 // pred_region
      _
    $region13: #{_lambda_.1} parent=1 // pred_fallthru
      _
    // Predicated region
    $region14: #{_lambda_.1} parent=1 // pred_check
      _
    $region15: #{_lambda_.1} parent=1 // pred_check_branch
      %29 = sbr.rel (0) target = $region17
    $region16: #{_lambda_.1} parent=1 // pred_region
      _
    $region17: #{_lambda_.1} parent=1 // pred_fallthru
      _
    // Predicated region
    $region18: #{_lambda_.1} parent=1 // pred_check
      _
    $region19: #{_lambda_.1} parent=1 // pred_check_branch
      %31 = sbr.rel (0) target = $region21
    $region20: #{_lambda_.1} parent=1 // pred_region
      _
    $region21: #{_lambda_.1} parent=1 // pred_fallthru
      _
    // Predicated region
    $region22: #{_lambda_.1} parent=1 // pred_check
      _
    $region23: #{_lambda_.1} parent=1 // pred_check_branch
      %33 = sbr.rel (0) target = $region25
    $region24: #{_lambda_.1} parent=1 // pred_region
      _
    $region25: #{_lambda_.1} parent=1 // pred_fallthru
      _
    // Predicated region
    $region26: #{_lambda_.1} parent=1 // pred_check
      _
    $region27: #{_lambda_.1} parent=1 // pred_check_branch
      %35 = sbr.rel (0) target = $region29
    $region28: #{_lambda_.1} parent=1 // pred_region
      _
    $region29: #{_lambda_.1} parent=1 // pred_fallthru
      _
    // Predicated region
    $region30: #{_lambda_.1} parent=1 // pred_check
      _
    $region31: #{_lambda_.1} parent=1 // pred_check_branch
      %37 = sbr.rel (0) target = $region33
    $region32: #{_lambda_.1} parent=1 // pred_region
      _
    $region33: #{_lambda_.1} parent=1 // pred_fallthru
      _
    // Predicated region
    $region34: #{_lambda_.1} parent=1 // pred_check
      _
    $region35: #{_lambda_.1} parent=1 // pred_check_branch
      %39 = sbr.rel (0) target = $region37
    $region36: #{_lambda_.1} parent=1 // pred_region
      _
    $region37: #{_lambda_.1} parent=1 // pred_fallthru
      _
    // Predicated region
    $region38: #{_lambda_.1} parent=1 // pred_check
      _
    $region39: #{_lambda_.1} parent=1 // pred_check_branch
      %41 = sbr.rel (0) target = $region41
    $region40: #{_lambda_.1} parent=1 // pred_region
      _
    $region41: #{_lambda_.1} parent=1 // pred_fallthru
      _
    // Predicated region
    $region42: #{_lambda_.1} parent=1 // pred_check
      _
    $region43: #{_lambda_.1} parent=1 // pred_check_branch
      %43 = sbr.rel (0) target = $region45
    $region44: #{_lambda_.1} parent=1 // pred_region
      _
    $region45: #{_lambda_.1} parent=1 // pred_fallthru
      _
    // Predicated region
    $region46: #{_lambda_.1} parent=1 // pred_check
      _
    $region47: #{_lambda_.1} parent=1 // pred_check_branch
      %45 = sbr.rel (0) target = $region49
    $region48: #{_lambda_.1} parent=1 // pred_region
      _
    $region49: #{_lambda_.1} parent=1 // pred_fallthru
      _
    %v47 = vld [vmem:[%s0] sm:$0xf]
    %v48 = vld [vmem:[%s0 + $0x4] sm:$0xf]
    %v49 = vld [vmem:[%s0 + $0x8] sm:$0xf]
    %v50 = vld [vmem:[%s0 + $0xc] sm:$0xf]
    %v51 = vld [vmem:[%s0 + $0x10] sm:$0xf]
    %v52 = vld [vmem:[%s0 + $0x14] sm:$0xf]
    %v53 = vld [vmem:[%s0 + $0x18] sm:$0xf]
    %v54 = vld [vmem:[%s0 + $0x1c] sm:$0xf]
    %v55 = vld [vmem:[%s0 + $0x20] sm:$0xf]
    %v56 = vld [vmem:[%s0 + $0x24] sm:$0xf]
    %v57 = vld [vmem:[%s0 + $0x28] sm:$0xf]
    %v58 = vld [vmem:[%s0 + $0x2c] sm:$0xf]
    %v59 = vld [vmem:[%s0 + $0x30] sm:$0xf]
    %v60 = vld [vmem:[%s0 + $0x34] sm:$0xf]
    %v61 = vld [vmem:[%s0 + $0x38] sm:$0xf]
    %v62 = vld [vmem:[%s0 + $0x3c] sm:$0xf]
    %v63 = vld [vmem:[%s0 + $0x40] sm:$0xf]
    %v64 = vld [vmem:[%s0 + $0x44] sm:$0xf]
    %v65 = vld [vmem:[%s0 + $0x48] sm:$0xf]
    %v66 = vld [vmem:[%s0 + $0x4c] sm:$0xf]
    %v67 = vld [vmem:[%s0 + $0x50] sm:$0xf]
    %v68 = vld [vmem:[%s0 + $0x54] sm:$0xf]
    %v69 = vld [vmem:[%s0 + $0x58] sm:$0xf]
    %v70 = vld [vmem:[%s0 + $0x5c] sm:$0xf]
    %v71 = vld [vmem:[%s0 + $0x60] sm:$0xf]
    %v72 = vld [vmem:[%s0 + $0x64] sm:$0xf]
    %v73 = vld [vmem:[%s0 + $0x68] sm:$0xf]
    %v74 = vld [vmem:[%s0 + $0x6c] sm:$0xf]
    %v75 = vld [vmem:[%s0 + $0x70] sm:$0xf]
    %v76 = vld [vmem:[%s0 + $0x74] sm:$0xf]
    %v77 = vld [vmem:[%s0 + $0x78] sm:$0xf]
    %v78 = vld [vmem:[%s0 + $0x7c] sm:$0xf]
    %v79 = vld [vmem:[%s0 + $0x80] sm:$0xf]
    %v80 = vld [vmem:[%s0 + $0x84] sm:$0xf]
    %v81 = vld [vmem:[%s0 + $0x88] sm:$0xf]
    %v82 = vld [vmem:[%s0 + $0x8c] sm:$0xf]
    %v83 = vld [vmem:[%s0 + $0x90] sm:$0xf]
    %v84 = vld [vmem:[%s0 + $0x94] sm:$0xf]
    %v85 = vld [vmem:[%s0 + $0x98] sm:$0xf]
    %v86 = vld [vmem:[%s0 + $0x9c] sm:$0xf]
    %v87 = vld [vmem:[%s0 + $0xa0] sm:$0xf]
    %v88 = vld [vmem:[%s0 + $0xa4] sm:$0xf]
    %v89 = vld [vmem:[%s0 + $0xa8] sm:$0xf]
    %v90 = vld [vmem:[%s0 + $0xac] sm:$0xf]
    %v91 = vld [vmem:[%s0 + $0xb0] sm:$0xf]
    %v92 = vld [vmem:[%s0 + $0xb4] sm:$0xf]
    %v93 = vld [vmem:[%s0 + $0xb8] sm:$0xf]
    %v94 = vld [vmem:[%s0 + $0xbc] sm:$0xf]
    %v95 = vld [vmem:[%s0 + $0xc0] sm:$0xf]
    %v96 = vld [vmem:[%s0 + $0xc4] sm:$0xf]
    %v97 = vld [vmem:[%s0 + $0xc8] sm:$0xf]
    %v98 = vld [vmem:[%s0 + $0xcc] sm:$0xf]
    %v99 = vld [vmem:[%s0 + $0xd0] sm:$0xf]
    %v100 = vld [vmem:[%s0 + $0xd4] sm:$0xf]
    %v101 = vld [vmem:[%s0 + $0xd8] sm:$0xf]
    %v102 = vld [vmem:[%s0 + $0xdc] sm:$0xf]
    %v103 = vld [vmem:[%s0 + $0xe0] sm:$0xf]
    %v104 = vld [vmem:[%s0 + $0xe4] sm:$0xf]
    %v105 = vld [vmem:[%s0 + $0xe8] sm:$0xf]
    %v106 = vld [vmem:[%s0 + $0xec] sm:$0xf]
    %v107 = vld [vmem:[%s0 + $0xf0] sm:$0xf]
    %v108 = vld [vmem:[%s0 + $0xf4] sm:$0xf]
    %v109 = vld [vmem:[%s0 + $0xf8] sm:$0xf]
    %v110 = vld [vmem:[%s0 + $0xfc] sm:$0xf]
    %v111 = vld [vmem:[%s1] sm:$0xf]
    %v112 = vld [vmem:[%s1 + $0x4] sm:$0xf]
    %v113 = vld [vmem:[%s1 + $0x8] sm:$0xf]
    %v114 = vld [vmem:[%s1 + $0xc] sm:$0xf]
    %v115 = vld [vmem:[%s1 + $0x10] sm:$0xf]
    %v116 = vld [vmem:[%s1 + $0x14] sm:$0xf]
    %v117 = vld [vmem:[%s1 + $0x18] sm:$0xf]
    %v118 = vld [vmem:[%s1 + $0x1c] sm:$0xf]
    %v119 = vld [vmem:[%s1 + $0x20] sm:$0xf]
    %v120 = vld [vmem:[%s1 + $0x24] sm:$0xf]
    %v121 = vld [vmem:[%s1 + $0x28] sm:$0xf]
    %v122 = vld [vmem:[%s1 + $0x2c] sm:$0xf]
    %v123 = vld [vmem:[%s1 + $0x30] sm:$0xf]
    %v124 = vld [vmem:[%s1 + $0x34] sm:$0xf]
    %v125 = vld [vmem:[%s1 + $0x38] sm:$0xf]
    %v126 = vld [vmem:[%s1 + $0x3c] sm:$0xf]
    %v191 = vunpack.c.l.b16 %v47
    %v192 = vunpack.c.l.b16 %v48
    %v193 = vunpack.c.l.b16 %v49
    %v194 = vunpack.c.l.b16 %v50
    %v195 = vunpack.c.l.b16 %v51
    %v196 = vunpack.c.l.b16 %v52
    %v197 = vunpack.c.l.b16 %v53
    %v198 = vunpack.c.l.b16 %v54
    %v199 = vunpack.c.l.b16 %v55
    %v200 = vunpack.c.l.b16 %v56
    %v201 = vunpack.c.l.b16 %v57
    %v202 = vunpack.c.l.b16 %v58
    %v203 = vunpack.c.l.b16 %v59
    %v204 = vunpack.c.l.b16 %v60
    %v205 = vunpack.c.l.b16 %v61
    %v206 = vunpack.c.l.b16 %v62
    %v207 = vunpack.c.l.b16 %v63
    %v208 = vunpack.c.l.b16 %v64
    %v209 = vunpack.c.l.b16 %v65
    %v210 = vunpack.c.l.b16 %v66
    %v211 = vunpack.c.l.b16 %v67
    %v212 = vunpack.c.l.b16 %v68
    %v213 = vunpack.c.l.b16 %v69
    %v214 = vunpack.c.l.b16 %v70
    %v215 = vunpack.c.l.b16 %v71
    %v216 = vunpack.c.l.b16 %v72
    %v217 = vunpack.c.l.b16 %v73
    %v218 = vunpack.c.l.b16 %v74
    %v219 = vunpack.c.l.b16 %v75
    %v220 = vunpack.c.l.b16 %v76
    %v221 = vunpack.c.l.b16 %v77
    %v222 = vunpack.c.l.b16 %v78
    %v223 = vunpack.c.l.b16 %v79
    %v224 = vunpack.c.l.b16 %v80
    %v225 = vunpack.c.l.b16 %v81
    %v226 = vunpack.c.l.b16 %v82
    %v227 = vunpack.c.l.b16 %v83
    %v228 = vunpack.c.l.b16 %v84
    %v229 = vunpack.c.l.b16 %v85
    %v230 = vunpack.c.l.b16 %v86
    %v231 = vunpack.c.l.b16 %v87
    %v232 = vunpack.c.l.b16 %v88
    %v233 = vunpack.c.l.b16 %v89
    %v234 = vunpack.c.l.b16 %v90
    %v235 = vunpack.c.l.b16 %v91
    %v236 = vunpack.c.l.b16 %v92
    %v237 = vunpack.c.l.b16 %v93
    %v238 = vunpack.c.l.b16 %v94
    %v239 = vunpack.c.l.b16 %v95
    %v240 = vunpack.c.l.b16 %v96
    %v241 = vunpack.c.l.b16 %v97
    %v242 = vunpack.c.l.b16 %v98
    %v243 = vunpack.c.l.b16 %v99
    %v244 = vunpack.c.l.b16 %v100
    %v245 = vunpack.c.l.b16 %v101
    %v246 = vunpack.c.l.b16 %v102
    %v247 = vunpack.c.l.b16 %v103
    %v248 = vunpack.c.l.b16 %v104
    %v249 = vunpack.c.l.b16 %v105
    %v250 = vunpack.c.l.b16 %v106
    %v251 = vunpack.c.l.b16 %v107
    %v252 = vunpack.c.l.b16 %v108
    %v253 = vunpack.c.l.b16 %v109
    %v254 = vunpack.c.l.b16 %v110
    %v255 = vpack.c.b16 %v192, %v191
    %v256 = vpack.c.b16 %v194, %v193
    %v257 = vpack.c.b16 %v196, %v195
    %v258 = vpack.c.b16 %v198, %v197
    %v259 = vpack.c.b16 %v200, %v199
    %v260 = vpack.c.b16 %v202, %v201
    %v261 = vpack.c.b16 %v204, %v203
    %v262 = vpack.c.b16 %v206, %v205
    %v263 = vpack.c.b16 %v208, %v207
    %v264 = vpack.c.b16 %v210, %v209
    %v265 = vpack.c.b16 %v212, %v211
    %v266 = vpack.c.b16 %v214, %v213
    %v267 = vpack.c.b16 %v216, %v215
    %v268 = vpack.c.b16 %v218, %v217
    %v269 = vpack.c.b16 %v220, %v219
    %v270 = vpack.c.b16 %v222, %v221
    %v271 = vpack.c.b16 %v224, %v223
    %v272 = vpack.c.b16 %v226, %v225
    %v273 = vpack.c.b16 %v228, %v227
    %v274 = vpack.c.b16 %v230, %v229
    %v275 = vpack.c.b16 %v232, %v231
    %v276 = vpack.c.b16 %v234, %v233
    %v277 = vpack.c.b16 %v236, %v235
    %v278 = vpack.c.b16 %v238, %v237
    %v279 = vpack.c.b16 %v240, %v239
    %v280 = vpack.c.b16 %v242, %v241
    %v281 = vpack.c.b16 %v244, %v243
    %v282 = vpack.c.b16 %v246, %v245
    %v283 = vpack.c.b16 %v248, %v247
    %v284 = vpack.c.b16 %v250, %v249
    %v285 = vpack.c.b16 %v252, %v251
    %v286 = vpack.c.b16 %v254, %v253
    %v335 = vunpack.c.l.b16 %v111
    %v336 = vunpack.c.l.b16 %v112
    %v337 = vunpack.c.l.b16 %v113
    %v338 = vunpack.c.l.b16 %v114
    %v339 = vunpack.c.l.b16 %v115
    %v340 = vunpack.c.l.b16 %v116
    %v341 = vunpack.c.l.b16 %v117
    %v342 = vunpack.c.l.b16 %v118
    %v343 = vunpack.c.l.b16 %v119
    %v344 = vunpack.c.l.b16 %v120
    %v345 = vunpack.c.l.b16 %v121
    %v346 = vunpack.c.l.b16 %v122
    %v347 = vunpack.c.l.b16 %v123
    %v348 = vunpack.c.l.b16 %v124
    %v349 = vunpack.c.l.b16 %v125
    %v350 = vunpack.c.l.b16 %v126
    %v351 = vpack.c.b16 %v336, %v335
    %v352 = vpack.c.b16 %v338, %v337
    %v353 = vpack.c.b16 %v340, %v339
    %v354 = vpack.c.b16 %v342, %v341
    %v355 = vpack.c.b16 %v344, %v343
    %v356 = vpack.c.b16 %v346, %v345
    %v357 = vpack.c.b16 %v348, %v347
    %v358 = vpack.c.b16 %v350, %v349
    %367 = vmatprep.subr.bf16.mxu0 0
    %368 = vmatpush1.bf16.msra.mxu0 %v358
    %369 = vmatprep.subr.bf16.mxu0 0
    %370 = vmatpush1.bf16.msra.mxu0 %v357
    %371 = vmatprep.subr.bf16.mxu0 0
    %372 = vmatpush1.bf16.msra.mxu0 %v356
    %373 = vmatprep.subr.bf16.mxu0 0
    %374 = vmatpush1.bf16.msra.mxu0 %v355
    %375 = vmatprep.subr.bf16.mxu0 0
    %376 = vmatpush1.bf16.msra.mxu0 %v354
    %377 = vmatprep.subr.bf16.mxu0 0
    %378 = vmatpush1.bf16.msra.mxu0 %v353
    %379 = vmatprep.subr.bf16.mxu0 0
    %380 = vmatpush1.bf16.msra.mxu0 %v352
    %381 = vmatprep.subr.bf16.mxu0 0
    %382 = vmatpush1.bf16.msra.mxu0 %v351
    %383 = vmatprep.subr.bf16.mxu0 0
    %384 = vmatpush2.bf16.msra.mxu0 0
    %385 = vmatprep.subr.bf16.mxu0 0
    %386 = vmatpush2.bf16.msra.mxu0 0
    %387 = vmatprep.subr.bf16.mxu0 0
    %388 = vmatpush2.bf16.msra.mxu0 0
    %389 = vmatprep.subr.bf16.mxu0 0
    %390 = vmatpush2.bf16.msra.mxu0 0
    %391 = vmatprep.subr.bf16.mxu0 0
    %392 = vmatpush2.bf16.msra.mxu0 0
    %393 = vmatprep.subr.bf16.mxu0 0
    %394 = vmatpush2.bf16.msra.mxu0 0
    %395 = vmatprep.subr.bf16.mxu0 0
    %396 = vmatpush2.bf16.msra.mxu0 0
    %397 = vmatprep.subr.bf16.mxu0 0
    %398 = vmatpush2.bf16.msra.mxu0 0
    %399 = vmatprep.mubr.bf16.mxu0 0
    %400 = vmatmul.mubr.bf16.gmra.mxu0 %v255
    %v401 = vpop.f32.mrf.mxu0
    %v402 = vadd.f32 0.0, %v401
    %v403 = vpop.f32.mrf.mxu0
    %v404 = vpop.f32.mrf.mxu0
    %v405 = vadd.f32 0.0, %v404
    %v406 = vpop.f32.mrf.mxu0
    %407 = vmatprep.mubr.bf16.mxu0 0
    %408 = vmatmul.mubr.bf16.gmra.mxu0 %v256
    %v409 = vpop.f32.mrf.mxu0
    %v410 = vadd.f32 0.0, %v409
    %v411 = vpop.f32.mrf.mxu0
    %v412 = vpop.f32.mrf.mxu0
    %v413 = vadd.f32 0.0, %v412
    %v414 = vpop.f32.mrf.mxu0
    %415 = vmatprep.mubr.bf16.mxu0 0
    %416 = vmatmul.mubr.bf16.gmra.mxu0 %v257
    %v417 = vpop.f32.mrf.mxu0
    %v418 = vadd.f32 0.0, %v417
    %v419 = vpop.f32.mrf.mxu0
    %v420 = vpop.f32.mrf.mxu0
    %v421 = vadd.f32 0.0, %v420
    %v422 = vpop.f32.mrf.mxu0
    %423 = vmatprep.mubr.bf16.mxu0 0
    %424 = vmatmul.mubr.bf16.gmra.mxu0 %v258
    %v425 = vpop.f32.mrf.mxu0
    %v426 = vadd.f32 0.0, %v425
    %v427 = vpop.f32.mrf.mxu0
    %v428 = vpop.f32.mrf.mxu0
    %v429 = vadd.f32 0.0, %v428
    %v430 = vpop.f32.mrf.mxu0
    %431 = vmatprep.mubr.bf16.mxu0 0
    %432 = vmatmul.mubr.bf16.gmra.mxu0 %v259
    %v433 = vpop.f32.mrf.mxu0
    %v434 = vadd.f32 0.0, %v433
    %v435 = vpop.f32.mrf.mxu0
    %v436 = vpop.f32.mrf.mxu0
    %v437 = vadd.f32 0.0, %v436
    %v438 = vpop.f32.mrf.mxu0
    %439 = vmatprep.mubr.bf16.mxu0 0
    %440 = vmatmul.mubr.bf16.gmra.mxu0 %v260
    %v441 = vpop.f32.mrf.mxu0
    %v442 = vadd.f32 0.0, %v441
    %v443 = vpop.f32.mrf.mxu0
    %v444 = vpop.f32.mrf.mxu0
    %v445 = vadd.f32 0.0, %v444
    %v446 = vpop.f32.mrf.mxu0
    %447 = vmatprep.mubr.bf16.mxu0 0
    %448 = vmatmul.mubr.bf16.gmra.mxu0 %v261
    %v449 = vpop.f32.mrf.mxu0
    %v450 = vadd.f32 0.0, %v449
    %v451 = vpop.f32.mrf.mxu0
    %v452 = vpop.f32.mrf.mxu0
    %v453 = vadd.f32 0.0, %v452
    %v454 = vpop.f32.mrf.mxu0
    %455 = vmatprep.mubr.bf16.mxu0 0
    %456 = vmatmul.mubr.bf16.gmra.mxu0 %v262
    %v457 = vpop.f32.mrf.mxu0
    %v458 = vadd.f32 0.0, %v457
    %v459 = vpop.f32.mrf.mxu0
    %v460 = vpop.f32.mrf.mxu0
    %v461 = vadd.f32 0.0, %v460
    %v462 = vpop.f32.mrf.mxu0
    %463 = vmatprep.mubr.bf16.mxu0 0
    %464 = vmatmul.mubr.bf16.gmra.mxu0 %v263
    %v465 = vpop.f32.mrf.mxu0
    %v466 = vadd.f32 0.0, %v465
    %v467 = vpop.f32.mrf.mxu0
    %v468 = vpop.f32.mrf.mxu0
    %v469 = vadd.f32 0.0, %v468
    %v470 = vpop.f32.mrf.mxu0
    %471 = vmatprep.mubr.bf16.mxu0 0
    %472 = vmatmul.mubr.bf16.gmra.mxu0 %v264
    %v473 = vpop.f32.mrf.mxu0
    %v474 = vadd.f32 0.0, %v473
    %v475 = vpop.f32.mrf.mxu0
    %v476 = vpop.f32.mrf.mxu0
    %v477 = vadd.f32 0.0, %v476
    %v478 = vpop.f32.mrf.mxu0
    %479 = vmatprep.mubr.bf16.mxu0 0
    %480 = vmatmul.mubr.bf16.gmra.mxu0 %v265
    %v481 = vpop.f32.mrf.mxu0
    %v482 = vadd.f32 0.0, %v481
    %v483 = vpop.f32.mrf.mxu0
    %v484 = vpop.f32.mrf.mxu0
    %v485 = vadd.f32 0.0, %v484
    %v486 = vpop.f32.mrf.mxu0
    %487 = vmatprep.mubr.bf16.mxu0 0
    %488 = vmatmul.mubr.bf16.gmra.mxu0 %v266
    %v489 = vpop.f32.mrf.mxu0
    %v490 = vadd.f32 0.0, %v489
    %v491 = vpop.f32.mrf.mxu0
    %v492 = vpop.f32.mrf.mxu0
    %v493 = vadd.f32 0.0, %v492
    %v494 = vpop.f32.mrf.mxu0
    %495 = vmatprep.mubr.bf16.mxu0 0
    %496 = vmatmul.mubr.bf16.gmra.mxu0 %v267
    %v497 = vpop.f32.mrf.mxu0
    %v498 = vadd.f32 0.0, %v497
    %v499 = vpop.f32.mrf.mxu0
    %v500 = vpop.f32.mrf.mxu0
    %v501 = vadd.f32 0.0, %v500
    %v502 = vpop.f32.mrf.mxu0
    %503 = vmatprep.mubr.bf16.mxu0 0
    %504 = vmatmul.mubr.bf16.gmra.mxu0 %v268
    %v505 = vpop.f32.mrf.mxu0
    %v506 = vadd.f32 0.0, %v505
    %v507 = vpop.f32.mrf.mxu0
    %v508 = vpop.f32.mrf.mxu0
    %v509 = vadd.f32 0.0, %v508
    %v510 = vpop.f32.mrf.mxu0
    %511 = vmatprep.mubr.bf16.mxu0 0
    %512 = vmatmul.mubr.bf16.gmra.mxu0 %v269
    %v513 = vpop.f32.mrf.mxu0
    %v514 = vadd.f32 0.0, %v513
    %v515 = vpop.f32.mrf.mxu0
    %v516 = vpop.f32.mrf.mxu0
    %v517 = vadd.f32 0.0, %v516
    %v518 = vpop.f32.mrf.mxu0
    %519 = vmatprep.mubr.bf16.mxu0 0
    %520 = vmatmul.mubr.bf16.gmra.mxu0 %v270
    %v521 = vpop.f32.mrf.mxu0
    %v522 = vadd.f32 0.0, %v521
    %v523 = vpop.f32.mrf.mxu0
    %v524 = vpop.f32.mrf.mxu0
    %v525 = vadd.f32 0.0, %v524
    %v526 = vpop.f32.mrf.mxu0
    %527 = vmatprep.mubr.bf16.mxu0 0
    %528 = vmatmul.mubr.bf16.gmra.mxu0 %v271
    %v529 = vpop.f32.mrf.mxu0
    %v530 = vadd.f32 0.0, %v529
    %v531 = vpop.f32.mrf.mxu0
    %v532 = vpop.f32.mrf.mxu0
    %v533 = vadd.f32 0.0, %v532
    %v534 = vpop.f32.mrf.mxu0
    %535 = vmatprep.mubr.bf16.mxu0 0
    %536 = vmatmul.mubr.bf16.gmra.mxu0 %v272
    %v537 = vpop.f32.mrf.mxu0
    %v538 = vadd.f32 0.0, %v537
    %v539 = vpop.f32.mrf.mxu0
    %v540 = vpop.f32.mrf.mxu0
    %v541 = vadd.f32 0.0, %v540
    %v542 = vpop.f32.mrf.mxu0
    %543 = vmatprep.mubr.bf16.mxu0 0
    %544 = vmatmul.mubr.bf16.gmra.mxu0 %v273
    %v545 = vpop.f32.mrf.mxu0
    %v546 = vadd.f32 0.0, %v545
    %v547 = vpop.f32.mrf.mxu0
    %v548 = vpop.f32.mrf.mxu0
    %v549 = vadd.f32 0.0, %v548
    %v550 = vpop.f32.mrf.mxu0
    %551 = vmatprep.mubr.bf16.mxu0 0
    %552 = vmatmul.mubr.bf16.gmra.mxu0 %v274
    %v553 = vpop.f32.mrf.mxu0
    %v554 = vadd.f32 0.0, %v553
    %v555 = vpop.f32.mrf.mxu0
    %v556 = vpop.f32.mrf.mxu0
    %v557 = vadd.f32 0.0, %v556
    %v558 = vpop.f32.mrf.mxu0
    %559 = vmatprep.mubr.bf16.mxu0 0
    %560 = vmatmul.mubr.bf16.gmra.mxu0 %v275
    %v561 = vpop.f32.mrf.mxu0
    %v562 = vadd.f32 0.0, %v561
    %v563 = vpop.f32.mrf.mxu0
    %v564 = vpop.f32.mrf.mxu0
    %v565 = vadd.f32 0.0, %v564
    %v566 = vpop.f32.mrf.mxu0
    %567 = vmatprep.mubr.bf16.mxu0 0
    %568 = vmatmul.mubr.bf16.gmra.mxu0 %v276
    %v569 = vpop.f32.mrf.mxu0
    %v570 = vadd.f32 0.0, %v569
    %v571 = vpop.f32.mrf.mxu0
    %v572 = vpop.f32.mrf.mxu0
    %v573 = vadd.f32 0.0, %v572
    %v574 = vpop.f32.mrf.mxu0
    %575 = vmatprep.mubr.bf16.mxu0 0
    %576 = vmatmul.mubr.bf16.gmra.mxu0 %v277
    %v577 = vpop.f32.mrf.mxu0
    %v578 = vadd.f32 0.0, %v577
    %v579 = vpop.f32.mrf.mxu0
    %v580 = vpop.f32.mrf.mxu0
    %v581 = vadd.f32 0.0, %v580
    %v582 = vpop.f32.mrf.mxu0
    %583 = vmatprep.mubr.bf16.mxu0 0
    %584 = vmatmul.mubr.bf16.gmra.mxu0 %v278
    %v585 = vpop.f32.mrf.mxu0
    %v586 = vadd.f32 0.0, %v585
    %v587 = vpop.f32.mrf.mxu0
    %v588 = vpop.f32.mrf.mxu0
    %v589 = vadd.f32 0.0, %v588
    %v590 = vpop.f32.mrf.mxu0
    %591 = vmatprep.mubr.bf16.mxu0 0
    %592 = vmatmul.mubr.bf16.gmra.mxu0 %v279
    %v593 = vpop.f32.mrf.mxu0
    %v594 = vadd.f32 0.0, %v593
    %v595 = vpop.f32.mrf.mxu0
    %v596 = vpop.f32.mrf.mxu0
    %v597 = vadd.f32 0.0, %v596
    %v598 = vpop.f32.mrf.mxu0
    %599 = vmatprep.mubr.bf16.mxu0 0
    %600 = vmatmul.mubr.bf16.gmra.mxu0 %v280
    %v601 = vpop.f32.mrf.mxu0
    %v602 = vadd.f32 0.0, %v601
    %v603 = vpop.f32.mrf.mxu0
    %v604 = vpop.f32.mrf.mxu0
    %v605 = vadd.f32 0.0, %v604
    %v606 = vpop.f32.mrf.mxu0
    %607 = vmatprep.mubr.bf16.mxu0 0
    %608 = vmatmul.mubr.bf16.gmra.mxu0 %v281
    %v609 = vpop.f32.mrf.mxu0
    %v610 = vadd.f32 0.0, %v609
    %v611 = vpop.f32.mrf.mxu0
    %v612 = vpop.f32.mrf.mxu0
    %v613 = vadd.f32 0.0, %v612
    %v614 = vpop.f32.mrf.mxu0
    %615 = vmatprep.mubr.bf16.mxu0 0
    %616 = vmatmul.mubr.bf16.gmra.mxu0 %v282
    %v617 = vpop.f32.mrf.mxu0
    %v618 = vadd.f32 0.0, %v617
    %v619 = vpop.f32.mrf.mxu0
    %v620 = vpop.f32.mrf.mxu0
    %v621 = vadd.f32 0.0, %v620
    %v622 = vpop.f32.mrf.mxu0
    %623 = vmatprep.mubr.bf16.mxu0 0
    %624 = vmatmul.mubr.bf16.gmra.mxu0 %v283
    %v625 = vpop.f32.mrf.mxu0
    %v626 = vadd.f32 0.0, %v625
    %v627 = vpop.f32.mrf.mxu0
    %v628 = vpop.f32.mrf.mxu0
    %v629 = vadd.f32 0.0, %v628
    %v630 = vpop.f32.mrf.mxu0
    %631 = vmatprep.mubr.bf16.mxu0 0
    %632 = vmatmul.mubr.bf16.gmra.mxu0 %v284
    %v633 = vpop.f32.mrf.mxu0
    %v634 = vadd.f32 0.0, %v633
    %v635 = vpop.f32.mrf.mxu0
    %v636 = vpop.f32.mrf.mxu0
    %v637 = vadd.f32 0.0, %v636
    %v638 = vpop.f32.mrf.mxu0
    %639 = vmatprep.mubr.bf16.mxu0 0
    %640 = vmatmul.mubr.bf16.gmra.mxu0 %v285
    %v641 = vpop.f32.mrf.mxu0
    %v642 = vadd.f32 0.0, %v641
    %v643 = vpop.f32.mrf.mxu0
    %v644 = vpop.f32.mrf.mxu0
    %v645 = vadd.f32 0.0, %v644
    %v646 = vpop.f32.mrf.mxu0
    %647 = vmatprep.mubr.bf16.mxu0 0
    %648 = vmatmul.mubr.bf16.gmra.mxu0 %v286
    %v649 = vpop.f32.mrf.mxu0
    %v650 = vadd.f32 0.0, %v649
    %v651 = vpop.f32.mrf.mxu0
    %v652 = vpop.f32.mrf.mxu0
    %v653 = vadd.f32 0.0, %v652
    %v654 = vpop.f32.mrf.mxu0
    %655 = vdwg.mxu0
    %v656 = vmax.f32 %v402, 0.0
    %v657 = vmax.f32 %v405, 0.0
    %v658 = vmax.f32 %v410, 0.0
    %v659 = vmax.f32 %v413, 0.0
    %v660 = vmax.f32 %v418, 0.0
    %v661 = vmax.f32 %v421, 0.0
    %v662 = vmax.f32 %v426, 0.0
    %v663 = vmax.f32 %v429, 0.0
    %v664 = vmax.f32 %v434, 0.0
    %v665 = vmax.f32 %v437, 0.0
    %v666 = vmax.f32 %v442, 0.0
    %v667 = vmax.f32 %v445, 0.0
    %v668 = vmax.f32 %v450, 0.0
    %v669 = vmax.f32 %v453, 0.0
    %v670 = vmax.f32 %v458, 0.0
    %v671 = vmax.f32 %v461, 0.0
    %v672 = vmax.f32 %v466, 0.0
    %v673 = vmax.f32 %v469, 0.0
    %v674 = vmax.f32 %v474, 0.0
    %v675 = vmax.f32 %v477, 0.0
    %v676 = vmax.f32 %v482, 0.0
    %v677 = vmax.f32 %v485, 0.0
    %v678 = vmax.f32 %v490, 0.0
    %v679 = vmax.f32 %v493, 0.0
    %v680 = vmax.f32 %v498, 0.0
    %v681 = vmax.f32 %v501, 0.0
    %v682 = vmax.f32 %v506, 0.0
    %v683 = vmax.f32 %v509, 0.0
    %v684 = vmax.f32 %v514, 0.0
    %v685 = vmax.f32 %v517, 0.0
    %v686 = vmax.f32 %v522, 0.0
    %v687 = vmax.f32 %v525, 0.0
    %v688 = vmax.f32 %v530, 0.0
    %v689 = vmax.f32 %v533, 0.0
    %v690 = vmax.f32 %v538, 0.0
    %v691 = vmax.f32 %v541, 0.0
    %v692 = vmax.f32 %v546, 0.0
    %v693 = vmax.f32 %v549, 0.0
    %v694 = vmax.f32 %v554, 0.0
    %v695 = vmax.f32 %v557, 0.0
    %v696 = vmax.f32 %v562, 0.0
    %v697 = vmax.f32 %v565, 0.0
    %v698 = vmax.f32 %v570, 0.0
    %v699 = vmax.f32 %v573, 0.0
    %v700 = vmax.f32 %v578, 0.0
    %v701 = vmax.f32 %v581, 0.0
    %v702 = vmax.f32 %v586, 0.0
    %v703 = vmax.f32 %v589, 0.0
    %v704 = vmax.f32 %v594, 0.0
    %v705 = vmax.f32 %v597, 0.0
    %v706 = vmax.f32 %v602, 0.0
    %v707 = vmax.f32 %v605, 0.0
    %v708 = vmax.f32 %v610, 0.0
    %v709 = vmax.f32 %v613, 0.0
    %v710 = vmax.f32 %v618, 0.0
    %v711 = vmax.f32 %v621, 0.0
    %v712 = vmax.f32 %v626, 0.0
    %v713 = vmax.f32 %v629, 0.0
    %v714 = vmax.f32 %v634, 0.0
    %v715 = vmax.f32 %v637, 0.0
    %v716 = vmax.f32 %v642, 0.0
    %v717 = vmax.f32 %v645, 0.0
    %v718 = vmax.f32 %v650, 0.0
    %v719 = vmax.f32 %v653, 0.0
    %v720 = vadd.f32 %v656, %v657
    %v721 = vadd.f32 %v720, %v658
    %v722 = vadd.f32 %v721, %v659
    %v723 = vadd.f32 %v722, %v660
    %v724 = vadd.f32 %v723, %v661
    %v725 = vadd.f32 %v724, %v662
    %v726 = vadd.f32 %v725, %v663
    %v727 = vadd.f32 %v726, %v664
    %v728 = vadd.f32 %v727, %v665
    %v729 = vadd.f32 %v728, %v666
    %v730 = vadd.f32 %v729, %v667
    %v731 = vadd.f32 %v730, %v668
    %v732 = vadd.f32 %v731, %v669
    %v733 = vadd.f32 %v732, %v670
    %v734 = vadd.f32 %v733, %v671
    %v735 = vadd.f32 %v734, %v672
    %v736 = vadd.f32 %v735, %v673
    %v737 = vadd.f32 %v736, %v674
    %v738 = vadd.f32 %v737, %v675
    %v739 = vadd.f32 %v738, %v676
    %v740 = vadd.f32 %v739, %v677
    %v741 = vadd.f32 %v740, %v678
    %v742 = vadd.f32 %v741, %v679
    %v743 = vadd.f32 %v742, %v680
    %v744 = vadd.f32 %v743, %v681
    %v745 = vadd.f32 %v744, %v682
    %v746 = vadd.f32 %v745, %v683
    %v747 = vadd.f32 %v746, %v684
    %v748 = vadd.f32 %v747, %v685
    %v749 = vadd.f32 %v748, %v686
    %v750 = vadd.f32 %v749, %v687
    %v751 = vrot.slane %v750, 4
    %v752 = vadd.f32 %v750, %v751
    %v753 = vrot.slane %v752, 2
    %v754 = vadd.f32 %v752, %v753
    %v755 = vrot.slane %v754, 1
    %v756 = vadd.f32 %v754, %v755
    %v757 = vadd.f32 %v688, %v689
    %v758 = vadd.f32 %v757, %v690
    %v759 = vadd.f32 %v758, %v691
    %v760 = vadd.f32 %v759, %v692
    %v761 = vadd.f32 %v760, %v693
    %v762 = vadd.f32 %v761, %v694
    %v763 = vadd.f32 %v762, %v695
    %v764 = vadd.f32 %v763, %v696
    %v765 = vadd.f32 %v764, %v697
    %v766 = vadd.f32 %v765, %v698
    %v767 = vadd.f32 %v766, %v699
    %v768 = vadd.f32 %v767, %v700
    %v769 = vadd.f32 %v768, %v701
    %v770 = vadd.f32 %v769, %v702
    %v771 = vadd.f32 %v770, %v703
    %v772 = vadd.f32 %v771, %v704
    %v773 = vadd.f32 %v772, %v705
    %v774 = vadd.f32 %v773, %v706
    %v775 = vadd.f32 %v774, %v707
    %v776 = vadd.f32 %v775, %v708
    %v777 = vadd.f32 %v776, %v709
    %v778 = vadd.f32 %v777, %v710
    %v779 = vadd.f32 %v778, %v711
    %v780 = vadd.f32 %v779, %v712
    %v781 = vadd.f32 %v780, %v713
    %v782 = vadd.f32 %v781, %v714
    %v783 = vadd.f32 %v782, %v715
    %v784 = vadd.f32 %v783, %v716
    %v785 = vadd.f32 %v784, %v717
    %v786 = vadd.f32 %v785, %v718
    %v787 = vadd.f32 %v786, %v719
    %v788 = vrot.slane %v787, 4
    %v789 = vadd.f32 %v787, %v788
    %v790 = vrot.slane %v789, 2
    %v791 = vadd.f32 %v789, %v790
    %v792 = vrot.slane %v791, 1
    %v793 = vadd.f32 %v791, %v792
    %v794 = vrcp.pop 256.0
    %v795 = vmul.f32 %v756, %v794
    %v796 = vmul.f32 %v793, %v794
    %vm799 = vcmask 1041409
    %v800 = vsel %vm799, %v796, %v795
    %802 = vst [vmem:[#allocation2] sm:$0x3] %v800
    %v803 = vpack.c.bf16 %v795, %v795
    %v804 = vpack.c.bf16 %v796, %v796
    %v805 = vld [vmem:[%s2] sm:$0xf]
    %v806 = vld [vmem:[%s2 + $0x4] sm:$0xf]
    %v807 = vld [vmem:[%s2 + $0x8] sm:$0xf]
    %v808 = vld [vmem:[%s2 + $0xc] sm:$0xf]
    %v809 = vld [vmem:[%s2 + $0x10] sm:$0xf]
    %v810 = vld [vmem:[%s2 + $0x14] sm:$0xf]
    %v811 = vld [vmem:[%s2 + $0x18] sm:$0xf]
    %v812 = vld [vmem:[%s2 + $0x1c] sm:$0xf]
    %v813 = vld [vmem:[%s2 + $0x20] sm:$0xf]
    %v814 = vld [vmem:[%s2 + $0x24] sm:$0xf]
    %v815 = vld [vmem:[%s2 + $0x28] sm:$0xf]
    %v816 = vld [vmem:[%s2 + $0x2c] sm:$0xf]
    %v817 = vld [vmem:[%s2 + $0x30] sm:$0xf]
    %v818 = vld [vmem:[%s2 + $0x34] sm:$0xf]
    %v819 = vld [vmem:[%s2 + $0x38] sm:$0xf]
    %v820 = vld [vmem:[%s2 + $0x3c] sm:$0xf]
    %v823 = vunpack.c.l.b16 %v803
    %v824 = vunpack.c.l.b16 %v804
    %v825 = vsel %vm799, %v824, %v823
    %v826 = vpack.c.b16 %v825, %v825
    %v844 = vunpack.c.l.b16 %v805
    %v845 = vunpack.c.l.b16 %v806
    %v846 = vunpack.c.l.b16 %v807
    %v847 = vunpack.c.l.b16 %v808
    %v848 = vunpack.c.l.b16 %v809
    %v849 = vunpack.c.l.b16 %v810
    %v850 = vunpack.c.l.b16 %v811
    %v851 = vunpack.c.l.b16 %v812
    %v852 = vunpack.c.l.b16 %v813
    %v853 = vunpack.c.l.b16 %v814
    %v854 = vunpack.c.l.b16 %v815
    %v855 = vunpack.c.l.b16 %v816
    %v856 = vunpack.c.l.b16 %v817
    %v857 = vunpack.c.l.b16 %v818
    %v858 = vunpack.c.l.b16 %v819
    %v859 = vunpack.c.l.b16 %v820
    %v860 = vpack.c.b16 %v845, %v844
    %v861 = vpack.c.b16 %v847, %v846
    %v862 = vpack.c.b16 %v849, %v848
    %v863 = vpack.c.b16 %v851, %v850
    %v864 = vpack.c.b16 %v853, %v852
    %v865 = vpack.c.b16 %v855, %v854
    %v866 = vpack.c.b16 %v857, %v856
    %v867 = vpack.c.b16 %v859, %v858
    %876 = vmatprep.subr.bf16.mxu0 0
    %877 = vmatpush1.bf16.msra.mxu0 %v867
    %878 = vmatprep.subr.bf16.mxu0 0
    %879 = vmatpush1.bf16.msra.mxu0 %v866
    %880 = vmatprep.subr.bf16.mxu0 0
    %881 = vmatpush1.bf16.msra.mxu0 %v865
    %882 = vmatprep.subr.bf16.mxu0 0
    %883 = vmatpush1.bf16.msra.mxu0 %v864
    %884 = vmatprep.subr.bf16.mxu0 0
    %885 = vmatpush1.bf16.msra.mxu0 %v863
    %886 = vmatprep.subr.bf16.mxu0 0
    %887 = vmatpush1.bf16.msra.mxu0 %v862
    %888 = vmatprep.subr.bf16.mxu0 0
    %889 = vmatpush1.bf16.msra.mxu0 %v861
    %890 = vmatprep.subr.bf16.mxu0 0
    %891 = vmatpush1.bf16.msra.mxu0 %v860
    %892 = vmatprep.subr.bf16.mxu0 0
    %893 = vmatpush2.bf16.msra.mxu0 0
    %894 = vmatprep.subr.bf16.mxu0 0
    %895 = vmatpush2.bf16.msra.mxu0 0
    %896 = vmatprep.subr.bf16.mxu0 0
    %897 = vmatpush2.bf16.msra.mxu0 0
    %898 = vmatprep.subr.bf16.mxu0 0
    %899 = vmatpush2.bf16.msra.mxu0 0
    %900 = vmatprep.subr.bf16.mxu0 0
    %901 = vmatpush2.bf16.msra.mxu0 0
    %902 = vmatprep.subr.bf16.mxu0 0
    %903 = vmatpush2.bf16.msra.mxu0 0
    %904 = vmatprep.subr.bf16.mxu0 0
    %905 = vmatpush2.bf16.msra.mxu0 0
    %906 = vmatprep.subr.bf16.mxu0 0
    %907 = vmatpush2.bf16.msra.mxu0 0
    %908 = vmatprep.mubr.bf16.mxu0 0
    %909 = vmatmul.mubr.bf16.gmra.mxu0 %v826
    %v910 = vpop.f32.mrf.mxu0
    %v911 = vadd.f32 0.0, %v910
    %v912 = vpop.f32.mrf.mxu0
    %v913 = vpop.f32.mrf.mxu0
    %v914 = vpop.f32.mrf.mxu0
    %915 = vdwg.mxu0
    %vm916 = vcmask 1041408
    %v917 = vsel %vm916, %v911, 0.0
    %v918 = vrot.slane %v917, 4
    %v919 = vadd.f32 %v917, %v918
    %v920 = vrot.slane %v919, 2
    %v921 = vadd.f32 %v919, %v920
    %v922 = vrot.slane %v921, 1
    %v923 = vadd.f32 %v921, %v922
    %v924 = vrcp.pop 2.0
    %v925 = vmul.f32 %v923, %v924
    %v926 = vsub.f32 %v911, %v925
    %v927 = vmul.f32 %v926, %v926
    %v928 = vsel %vm916, %v927, 0.0
    %v929 = vrot.slane %v928, 4
    %v930 = vadd.f32 %v928, %v929
    %v931 = vrot.slane %v930, 2
    %v932 = vadd.f32 %v930, %v931
    %v933 = vrot.slane %v932, 1
    %v934 = vadd.f32 %v932, %v933
    %v935 = vmul.f32 %v934, %v924
    %v936 = vadd.f32 %v935, 1e-05
    %v937 = vrsqrt.pop %v936
    %v938 = vmul.f32 %v926, %v937
    %v939 = vld [vmem:[%s3] sm:$0x1]
    %v941 = vlaneseq
    %v942 = vshrl.u32 %v941, 7
    %v943 = vsub.s32 0, %v942
    %v944 = vrot.slane %v939, %v943
    %v946 = vmul.f32 %v938, %v944
    %v947 = vld [vmem:[%s4] sm:$0x1]
    %v949 = vlaneseq
    %v950 = vshrl.u32 %v949, 7
    %v951 = vsub.s32 0, %v950
    %v952 = vrot.slane %v947, %v951
    %v954 = vadd.f32 %v946, %v952
    %v955 = vmax.f32 %v954, 0.0
    %v956 = vpack.c.bf16 %v955, %v955
    %v957 = vld [vmem:[%s5] sm:$0xf]
    %v958 = vld [vmem:[%s5 + $0x4] sm:$0xf]
    %v959 = vld [vmem:[%s5 + $0x8] sm:$0xf]
    %v960 = vld [vmem:[%s5 + $0xc] sm:$0xf]
    %v961 = vld [vmem:[%s5 + $0x10] sm:$0xf]
    %v962 = vld [vmem:[%s5 + $0x14] sm:$0xf]
    %v963 = vld [vmem:[%s5 + $0x18] sm:$0xf]
    %v964 = vld [vmem:[%s5 + $0x1c] sm:$0xf]
    %v965 = vld [vmem:[%s5 + $0x20] sm:$0xf]
    %v966 = vld [vmem:[%s5 + $0x24] sm:$0xf]
    %v967 = vld [vmem:[%s5 + $0x28] sm:$0xf]
    %v968 = vld [vmem:[%s5 + $0x2c] sm:$0xf]
    %v969 = vld [vmem:[%s5 + $0x30] sm:$0xf]
    %v970 = vld [vmem:[%s5 + $0x34] sm:$0xf]
    %v971 = vld [vmem:[%s5 + $0x38] sm:$0xf]
    %v972 = vld [vmem:[%s5 + $0x3c] sm:$0xf]
    %v973 = vld [vmem:[%s6] sm:$0x1]
    %v975 = vlaneseq
    %v976 = vshrl.u32 %v975, 7
    %v977 = vsub.s32 0, %v976
    %v978 = vrot.slane %v973, %v977
    %v996 = vunpack.c.l.b16 %v957
    %v997 = vunpack.c.l.b16 %v958
    %v998 = vunpack.c.l.b16 %v959
    %v999 = vunpack.c.l.b16 %v960
    %v1000 = vunpack.c.l.b16 %v961
    %v1001 = vunpack.c.l.b16 %v962
    %v1002 = vunpack.c.l.b16 %v963
    %v1003 = vunpack.c.l.b16 %v964
    %v1004 = vunpack.c.l.b16 %v965
    %v1005 = vunpack.c.l.b16 %v966
    %v1006 = vunpack.c.l.b16 %v967
    %v1007 = vunpack.c.l.b16 %v968
    %v1008 = vunpack.c.l.b16 %v969
    %v1009 = vunpack.c.l.b16 %v970
    %v1010 = vunpack.c.l.b16 %v971
    %v1011 = vunpack.c.l.b16 %v972
    %v1012 = vpack.c.b16 %v997, %v996
    %v1013 = vpack.c.b16 %v999, %v998
    %v1014 = vpack.c.b16 %v1001, %v1000
    %v1015 = vpack.c.b16 %v1003, %v1002
    %v1016 = vpack.c.b16 %v1005, %v1004
    %v1017 = vpack.c.b16 %v1007, %v1006
    %v1018 = vpack.c.b16 %v1009, %v1008
    %v1019 = vpack.c.b16 %v1011, %v1010
    %1028 = vmatprep.subr.bf16.mxu0 0
    %1029 = vmatpush1.bf16.msra.mxu0 %v1019
    %1030 = vmatprep.subr.bf16.mxu0 0
    %1031 = vmatpush1.bf16.msra.mxu0 %v1018
    %1032 = vmatprep.subr.bf16.mxu0 0
    %1033 = vmatpush1.bf16.msra.mxu0 %v1017
    %1034 = vmatprep.subr.bf16.mxu0 0
    %1035 = vmatpush1.bf16.msra.mxu0 %v1016
    %1036 = vmatprep.subr.bf16.mxu0 0
    %1037 = vmatpush1.bf16.msra.mxu0 %v1015
    %1038 = vmatprep.subr.bf16.mxu0 0
    %1039 = vmatpush1.bf16.msra.mxu0 %v1014
    %1040 = vmatprep.subr.bf16.mxu0 0
    %1041 = vmatpush1.bf16.msra.mxu0 %v1013
    %1042 = vmatprep.subr.bf16.mxu0 0
    %1043 = vmatpush1.bf16.msra.mxu0 %v1012
    %1044 = vmatprep.subr.bf16.mxu0 0
    %1045 = vmatpush2.bf16.msra.mxu0 0
    %1046 = vmatprep.subr.bf16.mxu0 0
    %1047 = vmatpush2.bf16.msra.mxu0 0
    %1048 = vmatprep.subr.bf16.mxu0 0
    %1049 = vmatpush2.bf16.msra.mxu0 0
    %1050 = vmatprep.subr.bf16.mxu0 0
    %1051 = vmatpush2.bf16.msra.mxu0 0
    %1052 = vmatprep.subr.bf16.mxu0 0
    %1053 = vmatpush2.bf16.msra.mxu0 0
    %1054 = vmatprep.subr.bf16.mxu0 0
    %1055 = vmatpush2.bf16.msra.mxu0 0
    %1056 = vmatprep.subr.bf16.mxu0 0
    %1057 = vmatpush2.bf16.msra.mxu0 0
    %1058 = vmatprep.subr.bf16.mxu0 0
    %1059 = vmatpush2.bf16.msra.mxu0 0
    %1060 = vmatprep.mubr.bf16.mxu0 0
    %1061 = vmatmul.mubr.bf16.gmra.mxu0 %v956
    %v1062 = vpop.f32.mrf.mxu0
    %v1063 = vadd.f32 %v978, %v1062
    %v1064 = vpop.f32.mrf.mxu0
    %v1065 = vpop.f32.mrf.mxu0
    %v1066 = vpop.f32.mrf.mxu0
    %1067 = vdwg.mxu0
    %1068 = vst [vmem:[#allocation4] sm:$0x3] %v1063
    %v1069 = vpack.c.bf16 %v1063, %v1063
    %v1070 = vld [vmem:[%s7] sm:$0xf]
    %v1071 = vld [vmem:[%s7 + $0x4] sm:$0xf]
    %v1072 = vld [vmem:[%s7 + $0x8] sm:$0xf]
    %v1073 = vld [vmem:[%s7 + $0xc] sm:$0xf]
    %v1074 = vld [vmem:[%s7 + $0x10] sm:$0xf]
    %v1075 = vld [vmem:[%s7 + $0x14] sm:$0xf]
    %v1076 = vld [vmem:[%s7 + $0x18] sm:$0xf]
    %v1077 = vld [vmem:[%s7 + $0x1c] sm:$0xf]
    %v1078 = vld [vmem:[%s7 + $0x20] sm:$0xf]
    %v1079 = vld [vmem:[%s7 + $0x24] sm:$0xf]
    %v1080 = vld [vmem:[%s7 + $0x28] sm:$0xf]
    %v1081 = vld [vmem:[%s7 + $0x2c] sm:$0xf]
    %v1082 = vld [vmem:[%s7 + $0x30] sm:$0xf]
    %v1083 = vld [vmem:[%s7 + $0x34] sm:$0xf]
    %v1084 = vld [vmem:[%s7 + $0x38] sm:$0xf]
    %v1085 = vld [vmem:[%s7 + $0x3c] sm:$0xf]
    %v1102 = vunpack.c.l.b16 %v1070
    %v1103 = vunpack.c.l.b16 %v1071
    %v1104 = vunpack.c.l.b16 %v1072
    %v1105 = vunpack.c.l.b16 %v1073
    %v1106 = vunpack.c.l.b16 %v1074
    %v1107 = vunpack.c.l.b16 %v1075
    %v1108 = vunpack.c.l.b16 %v1076
    %v1109 = vunpack.c.l.b16 %v1077
    %v1110 = vunpack.c.l.b16 %v1078
    %v1111 = vunpack.c.l.b16 %v1079
    %v1112 = vunpack.c.l.b16 %v1080
    %v1113 = vunpack.c.l.b16 %v1081
    %v1114 = vunpack.c.l.b16 %v1082
    %v1115 = vunpack.c.l.b16 %v1083
    %v1116 = vunpack.c.l.b16 %v1084
    %v1117 = vunpack.c.l.b16 %v1085
    %v1118 = vpack.c.b16 %v1103, %v1102
    %v1119 = vpack.c.b16 %v1105, %v1104
    %v1120 = vpack.c.b16 %v1107, %v1106
    %v1121 = vpack.c.b16 %v1109, %v1108
    %v1122 = vpack.c.b16 %v1111, %v1110
    %v1123 = vpack.c.b16 %v1113, %v1112
    %v1124 = vpack.c.b16 %v1115, %v1114
    %v1125 = vpack.c.b16 %v1117, %v1116
    %1134 = vmatprep.subr.bf16.mxu0 0
    %1135 = vmatpush1.bf16.msra.mxu0 %v1125
    %1136 = vmatprep.subr.bf16.mxu0 0
    %1137 = vmatpush1.bf16.msra.mxu0 %v1124
    %1138 = vmatprep.subr.bf16.mxu0 0
    %1139 = vmatpush1.bf16.msra.mxu0 %v1123
    %1140 = vmatprep.subr.bf16.mxu0 0
    %1141 = vmatpush1.bf16.msra.mxu0 %v1122
    %1142 = vmatprep.subr.bf16.mxu0 0
    %1143 = vmatpush1.bf16.msra.mxu0 %v1121
    %1144 = vmatprep.subr.bf16.mxu0 0
    %1145 = vmatpush1.bf16.msra.mxu0 %v1120
    %1146 = vmatprep.subr.bf16.mxu0 0
    %1147 = vmatpush1.bf16.msra.mxu0 %v1119
    %1148 = vmatprep.subr.bf16.mxu0 0
    %1149 = vmatpush1.bf16.msra.mxu0 %v1118
    %1150 = vmatprep.subr.bf16.mxu0 0
    %1151 = vmatpush2.bf16.msra.mxu0 0
    %1152 = vmatprep.subr.bf16.mxu0 0
    %1153 = vmatpush2.bf16.msra.mxu0 0
    %1154 = vmatprep.subr.bf16.mxu0 0
    %1155 = vmatpush2.bf16.msra.mxu0 0
    %1156 = vmatprep.subr.bf16.mxu0 0
    %1157 = vmatpush2.bf16.msra.mxu0 0
    %1158 = vmatprep.subr.bf16.mxu0 0
    %1159 = vmatpush2.bf16.msra.mxu0 0
    %1160 = vmatprep.subr.bf16.mxu0 0
    %1161 = vmatpush2.bf16.msra.mxu0 0
    %1162 = vmatprep.subr.bf16.mxu0 0
    %1163 = vmatpush2.bf16.msra.mxu0 0
    %1164 = vmatprep.subr.bf16.mxu0 0
    %1165 = vmatpush2.bf16.msra.mxu0 0
    %1166 = vmatprep.mubr.bf16.mxu0 0
    %1167 = vmatmul.mubr.bf16.gmra.mxu0 %v1069
    %v1168 = vpop.f32.mrf.mxu0
    %v1169 = vadd.f32 0.0, %v1168
    %v1170 = vpop.f32.mrf.mxu0
    %v1171 = vpop.f32.mrf.mxu0
    %v1172 = vpop.f32.mrf.mxu0
    %1173 = vdwg.mxu0
    %v1174 = vsel %vm916, %v1169, 0.0
    %v1175 = vrot.slane %v1174, 4
    %v1176 = vadd.f32 %v1174, %v1175
    %v1177 = vrot.slane %v1176, 2
    %v1178 = vadd.f32 %v1176, %v1177
    %v1179 = vrot.slane %v1178, 1
    %v1180 = vadd.f32 %v1178, %v1179
    %v1181 = vmul.f32 %v1180, %v924
    %v1182 = vsub.f32 %v1169, %v1181
    %v1183 = vmul.f32 %v1182, %v1182
    %v1184 = vsel %vm916, %v1183, 0.0
    %v1185 = vrot.slane %v1184, 4
    %v1186 = vadd.f32 %v1184, %v1185
    %v1187 = vrot.slane %v1186, 2
    %v1188 = vadd.f32 %v1186, %v1187
    %v1189 = vrot.slane %v1188, 1
    %v1190 = vadd.f32 %v1188, %v1189
    %v1191 = vmul.f32 %v1190, %v924
    %v1192 = vadd.f32 %v1191, 1e-05
    %v1193 = vrsqrt.pop %v1192
    %v1194 = vmul.f32 %v1182, %v1193
    %v1195 = vld [vmem:[%s8] sm:$0x1]
    %v1197 = vlaneseq
    %v1198 = vshrl.u32 %v1197, 7
    %v1199 = vsub.s32 0, %v1198
    %v1200 = vrot.slane %v1195, %v1199
    %v1202 = vmul.f32 %v1194, %v1200
    %v1203 = vld [vmem:[%s9] sm:$0x1]
    %v1205 = vlaneseq
    %v1206 = vshrl.u32 %v1205, 7
    %v1207 = vsub.s32 0, %v1206
    %v1208 = vrot.slane %v1203, %v1207
    %v1210 = vadd.f32 %v1202, %v1208
    %v1211 = vmax.f32 %v1210, 0.0
    %v1212 = vpack.c.bf16 %v1211, %v1211
    %v1213 = vld [vmem:[%s10] sm:$0xf]
    %v1214 = vld [vmem:[%s10 + $0x4] sm:$0xf]
    %v1215 = vld [vmem:[%s10 + $0x8] sm:$0xf]
    %v1216 = vld [vmem:[%s10 + $0xc] sm:$0xf]
    %v1217 = vld [vmem:[%s10 + $0x10] sm:$0xf]
    %v1218 = vld [vmem:[%s10 + $0x14] sm:$0xf]
    %v1219 = vld [vmem:[%s10 + $0x18] sm:$0xf]
    %v1220 = vld [vmem:[%s10 + $0x1c] sm:$0xf]
    %v1221 = vld [vmem:[%s10 + $0x20] sm:$0xf]
    %v1222 = vld [vmem:[%s10 + $0x24] sm:$0xf]
    %v1223 = vld [vmem:[%s10 + $0x28] sm:$0xf]
    %v1224 = vld [vmem:[%s10 + $0x2c] sm:$0xf]
    %v1225 = vld [vmem:[%s10 + $0x30] sm:$0xf]
    %v1226 = vld [vmem:[%s10 + $0x34] sm:$0xf]
    %v1227 = vld [vmem:[%s10 + $0x38] sm:$0xf]
    %v1228 = vld [vmem:[%s10 + $0x3c] sm:$0xf]
    %v1229 = vld [vmem:[%s11] sm:$0x1]
    %v1231 = vlaneseq
    %v1232 = vshrl.u32 %v1231, 7
    %v1233 = vsub.s32 0, %v1232
    %v1234 = vrot.slane %v1229, %v1233
    %v1252 = vunpack.c.l.b16 %v1213
    %v1253 = vunpack.c.l.b16 %v1214
    %v1254 = vunpack.c.l.b16 %v1215
    %v1255 = vunpack.c.l.b16 %v1216
    %v1256 = vunpack.c.l.b16 %v1217
    %v1257 = vunpack.c.l.b16 %v1218
    %v1258 = vunpack.c.l.b16 %v1219
    %v1259 = vunpack.c.l.b16 %v1220
    %v1260 = vunpack.c.l.b16 %v1221
    %v1261 = vunpack.c.l.b16 %v1222
    %v1262 = vunpack.c.l.b16 %v1223
    %v1263 = vunpack.c.l.b16 %v1224
    %v1264 = vunpack.c.l.b16 %v1225
    %v1265 = vunpack.c.l.b16 %v1226
    %v1266 = vunpack.c.l.b16 %v1227
    %v1267 = vunpack.c.l.b16 %v1228
    %v1268 = vpack.c.b16 %v1253, %v1252
    %v1269 = vpack.c.b16 %v1255, %v1254
    %v1270 = vpack.c.b16 %v1257, %v1256
    %v1271 = vpack.c.b16 %v1259, %v1258
    %v1272 = vpack.c.b16 %v1261, %v1260
    %v1273 = vpack.c.b16 %v1263, %v1262
    %v1274 = vpack.c.b16 %v1265, %v1264
    %v1275 = vpack.c.b16 %v1267, %v1266
    %1284 = vmatprep.subr.bf16.mxu0 0
    %1285 = vmatpush1.bf16.msra.mxu0 %v1275
    %1286 = vmatprep.subr.bf16.mxu0 0
    %1287 = vmatpush1.bf16.msra.mxu0 %v1274
    %1288 = vmatprep.subr.bf16.mxu0 0
    %1289 = vmatpush1.bf16.msra.mxu0 %v1273
    %1290 = vmatprep.subr.bf16.mxu0 0
    %1291 = vmatpush1.bf16.msra.mxu0 %v1272
    %1292 = vmatprep.subr.bf16.mxu0 0
    %1293 = vmatpush1.bf16.msra.mxu0 %v1271
    %1294 = vmatprep.subr.bf16.mxu0 0
    %1295 = vmatpush1.bf16.msra.mxu0 %v1270
    %1296 = vmatprep.subr.bf16.mxu0 0
    %1297 = vmatpush1.bf16.msra.mxu0 %v1269
    %1298 = vmatprep.subr.bf16.mxu0 0
    %1299 = vmatpush1.bf16.msra.mxu0 %v1268
    %1300 = vmatprep.subr.bf16.mxu0 0
    %1301 = vmatpush2.bf16.msra.mxu0 0
    %1302 = vmatprep.subr.bf16.mxu0 0
    %1303 = vmatpush2.bf16.msra.mxu0 0
    %1304 = vmatprep.subr.bf16.mxu0 0
    %1305 = vmatpush2.bf16.msra.mxu0 0
    %1306 = vmatprep.subr.bf16.mxu0 0
    %1307 = vmatpush2.bf16.msra.mxu0 0
    %1308 = vmatprep.subr.bf16.mxu0 0
    %1309 = vmatpush2.bf16.msra.mxu0 0
    %1310 = vmatprep.subr.bf16.mxu0 0
    %1311 = vmatpush2.bf16.msra.mxu0 0
    %1312 = vmatprep.subr.bf16.mxu0 0
    %1313 = vmatpush2.bf16.msra.mxu0 0
    %1314 = vmatprep.subr.bf16.mxu0 0
    %1315 = vmatpush2.bf16.msra.mxu0 0
    %1316 = vmatprep.mubr.bf16.mxu0 0
    %1317 = vmatmul.mubr.bf16.gmra.mxu0 %v1212
    %v1318 = vpop.f32.mrf.mxu0
    %v1319 = vadd.f32 %v1234, %v1318
    %v1320 = vpop.f32.mrf.mxu0
    %v1321 = vpop.f32.mrf.mxu0
    %v1322 = vpop.f32.mrf.mxu0
    %1323 = vdwg.mxu0
    %1324 = vst [vmem:[#allocation6] sm:$0x3] %v1319
    // Predicated region
    $region50: #{_lambda_.1} parent=1 // pred_check
      _
    $region51: #{_lambda_.1} parent=1 // pred_check_branch
      %1326 = sbr.rel (0) target = $region53
    $region52: #{_lambda_.1} parent=1 // pred_region
      %s1328 = ssub.s32 32, 32
      %1329 = vsyncadd [#allocation3], %s1328
      %s1331 = sshll.u32 [#allocation2], 4
      %s1332 = int_to_ptr.vmem [resolvable:$true] %s1331
      %1334 = dma.vmem_to_hbm [thread:$0]  %s1332, 32, %s12, [#allocation3]
    $region53: #{_lambda_.1} parent=1 // pred_fallthru
      _
    // Predicated region
    $region54: #{_lambda_.1} parent=1 // pred_check
      _
    $region55: #{_lambda_.1} parent=1 // pred_check_branch
      %1336 = sbr.rel (0) target = $region57
    $region56: #{_lambda_.1} parent=1 // pred_region
      %s1338 = ssub.s32 32, 32
      %1339 = vsyncadd [#allocation5], %s1338
      %s1341 = sshll.u32 [#allocation4], 4
      %s1342 = int_to_ptr.vmem [resolvable:$true] %s1341
      %1344 = dma.vmem_to_hbm [thread:$0]  %s1342, 32, %s13, [#allocation5]
    $region57: #{_lambda_.1} parent=1 // pred_fallthru
      _
    // Predicated region
    $region58: #{_lambda_.1} parent=1 // pred_check
      _
    $region59: #{_lambda_.1} parent=1 // pred_check_branch
      %1346 = sbr.rel (0) target = $region61
    $region60: #{_lambda_.1} parent=1 // pred_region
      %s1348 = ssub.s32 32, 32
      %1349 = vsyncadd [#allocation5], %s1348
      %s1351 = sshll.u32 [#allocation6], 4
      %s1352 = int_to_ptr.vmem [resolvable:$true] %s1351
      %1354 = dma.vmem_to_hbm [thread:$0]  %s1352, 32, %s14, [#allocation5]
    $region61: #{_lambda_.1} parent=1 // pred_fallthru
      _
    // Predicated region
    $region62: #{_lambda_.1} parent=1 // pred_check
      _
    $region63: #{_lambda_.1} parent=1 // pred_check_branch
      %1356 = sbr.rel (0) target = $region65
    $region64: #{_lambda_.1} parent=1 // pred_region
      %1357 = dma.done [#allocation3], 32
    $region65: #{_lambda_.1} parent=1 // pred_fallthru
      _
    // Predicated region
    $region66: #{_lambda_.1} parent=1 // pred_check
      _
    $region67: #{_lambda_.1} parent=1 // pred_check_branch
      %1359 = sbr.rel (0) target = $region69
    $region68: #{_lambda_.1} parent=1 // pred_region
      %1360 = dma.done [#allocation5], 32
    $region69: #{_lambda_.1} parent=1 // pred_fallthru
      _
    // Predicated region
    $region70: #{_lambda_.1} parent=1 // pred_check
      _
    $region71: #{_lambda_.1} parent=1 // pred_check_branch
      %1362 = sbr.rel (0) target = $region73
    $region72: #{_lambda_.1} parent=1 // pred_region
      %1363 = dma.done [#allocation5], 32
    $region73: #{_lambda_.1} parent=1 // pred_fallthru
      _
    %1364 = vsyncpa [#allocation3], 1
    %1365 = vsyncpa [#allocation5], 1

</llo_original>
